<compile_context>
chip_gen: v5e
topology: v5e:2x2
jax: 0.10.0
libtpu: 0.0.40
codegen_flags: <defaults>
</compile_context>

<pallas_src>
import functools
import math

import jax
import jax.numpy as jnp
from jax import lax
from jax.experimental import pallas as pl
from jax.experimental.pallas import tpu as pltpu


# ---------------------------------------------------------------------------
# Kernel
# ---------------------------------------------------------------------------
def _attn_subblock_kernel(x_ref, gamma_ref, beta_ref,
                          wqkv_ref, bqkv_ref, wo_ref, bo_ref,
                          o_ref,
                          xn_sc, ctx_h_sc, ctx_cat_sc, *, num_heads):
    # x_ref block: (1, S, D) -> one batch element.
    _, S, D = x_ref.shape
    hd = D // num_heads
    scale = 1.0 / math.sqrt(hd)

    # ---- LayerNorm (f32 stats, eps=1e-6, biased variance, affine) ----
    x = x_ref[0].astype(jnp.float32)                        # (S, D)
    mean = jnp.mean(x, axis=-1, keepdims=True)
    var = jnp.mean((x - mean) ** 2, axis=-1, keepdims=True)
    xn = (x - mean) * lax.rsqrt(var + 1e-6)
    xn = xn * gamma_ref[...] + beta_ref[...]                # (S, D) f32
    xn_sc[...] = xn.astype(jnp.bfloat16)                    # resident bf16 LN output

    # ---- per-head attention, bounded live ranges via fori_loop ----
    # All in-loop indexing is leading-axis (cheap address offset): head-major
    # QKV weight/bias refs and head-major ctx scratch.  No dynamic lane slices.
    def head_body(h, carry):
        w_h = wqkv_ref[h]                                   # (D, 3*hd) bf16
        b_h = bqkv_ref[h]                                   # (1, 3*hd) f32

        # Per-head QKV projection: contraction depth D (full MXU depth),
        # bf16 operands, f32 accumulation.
        qkv = jnp.dot(xn_sc[...], w_h,
                      preferred_element_type=jnp.float32) + b_h   # (S, 3*hd)

        # Fold 1/sqrt(hd) into q once; static slices of a fresh value.
        q = (qkv[:, 0 * hd:1 * hd] * scale).astype(jnp.bfloat16)  # (S, hd)
        k = qkv[:, 1 * hd:2 * hd].astype(jnp.bfloat16)            # (S, hd)
        v = qkv[:, 2 * hd:3 * hd].astype(jnp.bfloat16)            # (S, hd)

        # Contract last dims of q and k (MXU consumes K transposed natively).
        s = lax.dot_general(q, k, dimension_numbers=(((1,), (1,)), ((), ())),
                            preferred_element_type=jnp.float32)   # (S, S) f32
        s = s - jnp.max(s, axis=-1, keepdims=True)
        p = jnp.exp(s)                                            # f32 (EUP)
        l = jnp.sum(p, axis=-1, keepdims=True)                    # (S, 1) f32

        ctx = jnp.dot(p.astype(jnp.bfloat16), v,
                      preferred_element_type=jnp.float32)         # (S, hd) f32
        # Normalize the small (S, hd) context via the EUP approximate
        # reciprocal instead of dividing the (S, S) probability matrix.
        ctx = ctx * pl.reciprocal(l, approx=True)

        ctx_h_sc[h] = ctx.astype(jnp.bfloat16)                    # leading-axis store
        return carry

    lax.fori_loop(0, num_heads, head_body, 0)

    # ---- assemble concat context at STATIC lane offsets, then one full-depth
    #      (S, D) @ (D, D) output projection ----
    for h in range(num_heads):
        ctx_cat_sc[:, h * hd:(h + 1) * hd] = ctx_h_sc[h]

    out = jnp.dot(ctx_cat_sc[...], wo_ref[...],
                  preferred_element_type=jnp.float32)             # (S, D) f32
    out = out + bo_ref[...]
    o_ref[0] = out.astype(o_ref.dtype)


# ---------------------------------------------------------------------------
# One-time parameter preparation (kept OUT of the per-call wrapper, review #8)
# ---------------------------------------------------------------------------
def prepare_params(params, num_heads):
    """Build kernel-layout parameters once: head-major bf16 QKV weight/bias,
    bf16 Wo.  Elementwise params (LN affine, biases) stay f32."""
    D = params["wq_t"].shape[0]
    hd = D // num_heads

    def head_major_w(w):   # (D, D) -> (H, D, hd)
        return w.reshape(D, num_heads, hd).transpose(1, 0, 2)

    def head_major_b(b):   # (1, D) -> (H, 1, hd)
        return b.reshape(1, num_heads, hd).transpose(1, 0, 2)

    wqkv_h = jnp.concatenate(
        [head_major_w(params["wq_t"]), head_major_w(params["wk_t"]),
         head_major_w(params["wv_t"])], axis=-1).astype(jnp.bfloat16)   # (H, D, 3*hd)
    bqkv_h = jnp.concatenate(
        [head_major_b(params["bq"]), head_major_b(params["bk"]),
         head_major_b(params["bv"])], axis=-1).astype(jnp.float32)      # (H, 1, 3*hd)

    return dict(
        gamma=params["gamma"], beta=params["beta"],
        wqkv_h=wqkv_h, bqkv_h=bqkv_h,
        wo=params["wo_t"].astype(jnp.bfloat16),                         # (D, D)
        bo=params["bo"],                                                # (1, D)
    )


# ---------------------------------------------------------------------------
# pallas_call construction
# ---------------------------------------------------------------------------
def _vmem_limit_bytes(B, S, D, H, single_buffer_weights):
    hd = D // H
    wbytes = (H * D * 3 * hd + D * D) * 2 + (H * 3 * hd + 4 * D) * 4
    wbufs = 1 if single_buffer_weights else 2
    io_blocks = 2 * (S * D * 4) * 2            # double-buffered x / out blocks
    scratch = (S * D + H * S * hd + S * D) * 2
    temps = 2 * S * S * 4 + 4 * S * 3 * hd     # (S,S) score/p + qkv temporaries
    need = int((wbytes * wbufs + io_blocks + scratch + temps) * 1.5) + (4 << 20)
    try:
        cap = int(pltpu.get_tpu_info().vmem_capacity_bytes)
    except Exception:
        cap = 64 << 20                         # conservative: v7x per-TC VMEM
    return int(max(min(need, (cap * 3) // 4), 16 << 20))


def _build_attention_call(B, S, D, H, out_dtype, *, single_buffer_weights):
    hd = D // H
    kernel = functools.partial(_attn_subblock_kernel, num_heads=H)

    def const_spec(shape):
        nd = len(shape)
        index_map = lambda b, _nd=nd: (0,) * _nd
        if single_buffer_weights:
            # Grid-invariant operands: single-buffer to halve their VMEM use.
            return pl.BlockSpec(shape, index_map, pipeline_mode=pl.Buffered(1))
        return pl.BlockSpec(shape, index_map)

    in_specs = [
        pl.BlockSpec((1, S, D), lambda b: (b, 0, 0)),   # x
        const_spec((1, D)),                             # gamma (f32)
        const_spec((1, D)),                             # beta  (f32)
        const_spec((H, D, 3 * hd)),                     # head-major QKV weight (bf16)
        const_spec((H, 1, 3 * hd)),                     # head-major QKV bias   (f32)
        const_spec((D, D)),                             # Wo (bf16)
        const_spec((1, D)),                             # bo (f32)
    ]
    out_specs = pl.BlockSpec((1, S, D), lambda b: (b, 0, 0))

    scratch_shapes = [
        pltpu.VMEM((S, D), jnp.bfloat16),               # LN output
        pltpu.VMEM((H, S, hd), jnp.bfloat16),           # per-head contexts
        pltpu.VMEM((S, D), jnp.bfloat16),               # concat context
    ]

    flops = B * (2 * S * D * 3 * D + 4 * S * S * D + 2 * S * D * D)
    transcendentals = B * H * S * S
    bytes_accessed = (B * S * D * 4 * 2                 # x in + out (f32)
                      + (3 * D * D + D * D) * 2         # bf16 weights
                      + (3 * D + 4 * D) * 4)            # biases + LN affine
    cost = pl.CostEstimate(flops=flops, transcendentals=transcendentals,
                           bytes_accessed=bytes_accessed)

    return pl.pallas_call(
        kernel,
        out_shape=jax.ShapeDtypeStruct((B, S, D), out_dtype),
        grid=(B,),
        in_specs=in_specs,
        out_specs=out_specs,
        scratch_shapes=scratch_shapes,
        compiler_params=pltpu.CompilerParams(
            dimension_semantics=("parallel",),
            vmem_limit_bytes=_vmem_limit_bytes(B, S, D, H, single_buffer_weights)),
        cost_estimate=cost,
    )


def attention_sub_block(x, prepped, num_heads):
    """x: (B, S, D) float32.  prepped: output of prepare_params()."""
    B, S, D = x.shape
    args = (x, prepped["gamma"], prepped["beta"], prepped["wqkv_h"],
            prepped["bqkv_h"], prepped["wo"], prepped["bo"])
    try:
        fn = _build_attention_call(B, S, D, num_heads, x.dtype,
                                   single_buffer_weights=True)
        return fn(*args)
    except Exception:
        # pipeline_mode=pl.Buffered(1) not accepted by this jax/Mosaic build;
        # fall back to default double-buffered weight blocks (correctness
        # identical, slightly larger VMEM footprint).
        fn = _build_attention_call(B, S, D, num_heads, x.dtype,
                                   single_buffer_weights=False)
        return fn(*args)


# ---------------------------------------------------------------------------
# Pure-JAX reference + synthetic params
# ---------------------------------------------------------------------------
def attention_sub_block_ref(x, params, num_heads):
    """Pure-JAX f32 reference of the PyTorch forward, for validation."""
    B, S, D = x.shape
    hd = D // num_heads
    mean = jnp.mean(x, axis=-1, keepdims=True)
    var = jnp.mean((x - mean) ** 2, axis=-1, keepdims=True)
    xn = (x - mean) / jnp.sqrt(var + 1e-6)
    xn = xn * params["gamma"][0] + params["beta"][0]
    q = xn @ params["wq_t"] + params["bq"][0]
    k = xn @ params["wk_t"] + params["bk"][0]
    v = xn @ params["wv_t"] + params["bv"][0]
    q = q.reshape(B, S, num_heads, hd).transpose(0, 2, 1, 3)
    k = k.reshape(B, S, num_heads, hd).transpose(0, 2, 1, 3)
    v = v.reshape(B, S, num_heads, hd).transpose(0, 2, 1, 3)
    s = jnp.einsum("bhqd,bhkd->bhqk", q, k) / math.sqrt(hd)
    p = jax.nn.softmax(s, axis=-1)
    o = jnp.einsum("bhqk,bhkd->bhqd", p, v).transpose(0, 2, 1, 3).reshape(B, S, D)
    return o @ params["wo_t"] + params["bo"][0]


def init_params(key, dim):
    """Deterministic synthetic init matching nn.LayerNorm + nn.MultiheadAttention shapes."""
    ks = jax.random.split(key, 6)
    std = 0.05
    # in_proj_weight is (3*dim, dim) in torch; split and pre-transpose -> (dim, dim) each.
    wq_t = std * jax.random.normal(ks[0], (dim, dim), jnp.float32)
    wk_t = std * jax.random.normal(ks[1], (dim, dim), jnp.float32)
    wv_t = std * jax.random.normal(ks[2], (dim, dim), jnp.float32)
    wo_t = std * jax.random.normal(ks[3], (dim, dim), jnp.float32)
    bq = 0.01 * jax.random.normal(ks[4], (1, dim), jnp.float32)
    bk = jnp.zeros((1, dim), jnp.float32)
    bv = 0.01 * jax.random.normal(ks[5], (1, dim), jnp.float32)
    bo = jnp.zeros((1, dim), jnp.float32)
    gamma = jnp.ones((1, dim), jnp.float32)    # LayerNorm weight
    beta = jnp.zeros((1, dim), jnp.float32)    # LayerNorm bias
    return dict(gamma=gamma, beta=beta, wq_t=wq_t, wk_t=wk_t, wv_t=wv_t,
                bq=bq, bk=bk, bv=bv, wo_t=wo_t, bo=bo)


if __name__ == "__main__":
    # NOTE: real configs should use D (and ideally head_dim) as multiples of 128
    # for lane-dense tiles; this tiny demo shape just exercises correctness.
    B, S, D, H = 2, 8, 32, 4
    key = jax.random.PRNGKey(0)
    kx, kp = jax.random.split(key)
    x = jax.random.normal(kx, (B, S, D), jnp.float32)
    params = init_params(kp, D)

    prepped = prepare_params(params, num_heads=H)   # one-time weight prep (bf16, head-major)

    out = attention_sub_block(x, prepped, num_heads=H)
    out = jax.block_until_ready(out)

    ref = attention_sub_block_ref(x, params, num_heads=H)
    assert out.shape == (B, S, D)
    # Tolerance loosened vs. an all-f32 computation: matmul operands are bf16
    # (accumulation stays f32) and softmax normalization uses the EUP
    # approximate reciprocal.
    assert jnp.allclose(out, ref, rtol=5e-2, atol=5e-3), "mismatch vs JAX reference"

    print("KERNEL_OK")
</pallas_src>

<mosaic_0001>
module attributes {stable_mosaic.version = 11 : i64} {
  func.func @_attn_subblock_kernel(%arg0: i32, %arg1: memref<1x8x32xf32, #tpu.memory_space<vmem>>, %arg2: memref<1x32xf32, #tpu.memory_space<vmem>>, %arg3: memref<1x32xf32, #tpu.memory_space<vmem>>, %arg4: memref<4x32x24xbf16, #tpu.memory_space<vmem>>, %arg5: memref<4x1x24xf32, #tpu.memory_space<vmem>>, %arg6: memref<32x32xbf16, #tpu.memory_space<vmem>>, %arg7: memref<1x32xf32, #tpu.memory_space<vmem>>, %arg8: memref<1x8x32xf32, #tpu.memory_space<vmem>>, %arg9: memref<8x32xbf16, #tpu.memory_space<vmem>>, %arg10: memref<4x8x8xbf16, #tpu.memory_space<vmem>>, %arg11: memref<8x32xbf16, #tpu.memory_space<vmem>>) attributes {dimension_semantics = [#tpu.dimension_semantics<parallel>], iteration_bounds = array<i64: 2>, scalar_prefetch = 0 : i64, scratch_operands = 3 : i64, tpu.core_type = #tpu.core_type<tc>, window_params = [{transform_indices = @transform_0, window_bounds = array<i64: 1, 8, 32>}, {pipeline_mode = #tpu.pipeline_mode<synchronous>, transform_indices = @transform_1, window_bounds = array<i64: 1, 32>}, {pipeline_mode = #tpu.pipeline_mode<synchronous>, transform_indices = @transform_2, window_bounds = array<i64: 1, 32>}, {pipeline_mode = #tpu.pipeline_mode<synchronous>, transform_indices = @transform_3, window_bounds = array<i64: 4, 32, 24>}, {pipeline_mode = #tpu.pipeline_mode<synchronous>, transform_indices = @transform_4, window_bounds = array<i64: 4, 1, 24>}, {pipeline_mode = #tpu.pipeline_mode<synchronous>, transform_indices = @transform_5, window_bounds = array<i64: 32, 32>}, {pipeline_mode = #tpu.pipeline_mode<synchronous>, transform_indices = @transform_6, window_bounds = array<i64: 1, 32>}, {transform_indices = @transform_7, window_bounds = array<i64: 1, 8, 32>}]} {
    %c0 = arith.constant 0 : index
    %c0_0 = arith.constant 0 : index
    %c0_1 = arith.constant 0 : index
    %0 = vector.load %arg1[%c0, %c0_0, %c0_1] : memref<1x8x32xf32, #tpu.memory_space<vmem>>, vector<1x8x32xf32>
    %1 = vector.shape_cast %0 : vector<1x8x32xf32> to vector<8x32xf32>
    %cst = arith.constant dense<0.000000e+00> : vector<8xf32>
    %2 = vector.multi_reduction <add>, %1, %cst [1] : vector<8x32xf32> to vector<8xf32>
    %3 = vector.shape_cast %2 : vector<8xf32> to vector<8x1xf32>
    %cst_2 = arith.constant 3.200000e+01 : f32
    %4 = vector.broadcast %cst_2 : f32 to vector<8x1xf32>
    %5 = arith.divf %3, %4 : vector<8x1xf32>
    %6 = vector.broadcast %5 : vector<8x1xf32> to vector<8x32xf32>
    %7 = arith.subf %1, %6 : vector<8x32xf32>
    %8 = arith.mulf %7, %7 : vector<8x32xf32>
    %cst_3 = arith.constant dense<0.000000e+00> : vector<8xf32>
    %9 = vector.multi_reduction <add>, %8, %cst_3 [1] : vector<8x32xf32> to vector<8xf32>
    %10 = vector.shape_cast %9 : vector<8xf32> to vector<8x1xf32>
    %cst_4 = arith.constant 3.200000e+01 : f32
    %11 = vector.broadcast %cst_4 : f32 to vector<8x1xf32>
    %12 = arith.divf %10, %11 : vector<8x1xf32>
    %13 = vector.broadcast %5 : vector<8x1xf32> to vector<8x32xf32>
    %14 = arith.subf %1, %13 : vector<8x32xf32>
    %cst_5 = arith.constant 9.99999997E-7 : f32
    %15 = vector.broadcast %cst_5 : f32 to vector<8x1xf32>
    %16 = arith.addf %12, %15 : vector<8x1xf32>
    %17 = math.rsqrt %16 : vector<8x1xf32>
    %18 = vector.broadcast %17 : vector<8x1xf32> to vector<8x32xf32>
    %19 = arith.mulf %14, %18 : vector<8x32xf32>
    %c0_6 = arith.constant 0 : index
    %c0_7 = arith.constant 0 : index
    %20 = vector.load %arg2[%c0_6, %c0_7] : memref<1x32xf32, #tpu.memory_space<vmem>>, vector<1x32xf32>
    %21 = vector.broadcast %20 : vector<1x32xf32> to vector<8x32xf32>
    %22 = arith.mulf %19, %21 : vector<8x32xf32>
    %c0_8 = arith.constant 0 : index
    %c0_9 = arith.constant 0 : index
    %23 = vector.load %arg3[%c0_8, %c0_9] : memref<1x32xf32, #tpu.memory_space<vmem>>, vector<1x32xf32>
    %24 = vector.broadcast %23 : vector<1x32xf32> to vector<8x32xf32>
    %25 = arith.addf %22, %24 : vector<8x32xf32>
    %26 = arith.truncf %25 : vector<8x32xf32> to vector<8x32xbf16>
    %c0_10 = arith.constant 0 : index
    %c0_11 = arith.constant 0 : index
    %27 = vector.load %arg9[%c0_10, %c0_11] : memref<8x32xbf16, #tpu.memory_space<vmem>>, vector<8x32xbf16>
    tpu.vector_store %arg9[%c0_10, %c0_11], %26 {strides = array<i32>} : memref<8x32xbf16, #tpu.memory_space<vmem>>, vector<8x32xbf16>,
    %c0_i32 = arith.constant 0 : i32
    %c4_i32 = arith.constant 4 : i32
    %28 = arith.addi %c0_i32, %c4_i32 : i32
    %c1_i32 = arith.constant 1 : i32
    scf.for %arg12 = %c0_i32 to %28 step %c1_i32  : i32 {
      %50 = arith.index_cast %arg12 : i32 to index
      %c0_37 = arith.constant 0 : index
      %c0_38 = arith.constant 0 : index
      %51 = vector.load %arg4[%50, %c0_37, %c0_38] : memref<4x32x24xbf16, #tpu.memory_space<vmem>>, vector<1x32x24xbf16>
      %52 = vector.shape_cast %51 : vector<1x32x24xbf16> to vector<32x24xbf16>
      %53 = arith.index_cast %arg12 : i32 to index
      %c0_39 = arith.constant 0 : index
      %c0_40 = arith.constant 0 : index
      %54 = vector.load %arg5[%53, %c0_39, %c0_40] : memref<4x1x24xf32, #tpu.memory_space<vmem>>, vector<1x1x24xf32>
      %55 = vector.shape_cast %54 : vector<1x1x24xf32> to vector<1x24xf32>
      %c0_41 = arith.constant 0 : index
      %c0_42 = arith.constant 0 : index
      %56 = vector.load %arg9[%c0_41, %c0_42] : memref<8x32xbf16, #tpu.memory_space<vmem>>, vector<8x32xbf16>
      %cst_43 = arith.constant dense<0.000000e+00> : vector<8x24xf32>
      %57 = tpu.matmul %56, %52, %cst_43 {dimension_numbers = #tpu.dot_dimension_numbers<[1], [0], [0], [1], [0, 0, 1, 1], [], []>} : vector<8x32xbf16>, vector<32x24xbf16>, vector<8x24xf32> -> vector<8x24xf32>
      %58 = vector.broadcast %55 : vector<1x24xf32> to vector<8x24xf32>
      %59 = arith.addf %57, %58 : vector<8x24xf32>
      %60 = vector.extract_strided_slice %59 {offsets = [0, 0], sizes = [8, 8], strides = [1, 1]} : vector<8x24xf32> to vector<8x8xf32>
      %cst_44 = arith.constant 0.353553385 : f32
      %61 = vector.broadcast %cst_44 : f32 to vector<8x8xf32>
      %62 = arith.mulf %60, %61 : vector<8x8xf32>
      %63 = arith.truncf %62 : vector<8x8xf32> to vector<8x8xbf16>
      %64 = vector.extract_strided_slice %59 {offsets = [0, 8], sizes = [8, 8], strides = [1, 1]} : vector<8x24xf32> to vector<8x8xf32>
      %65 = arith.truncf %64 : vector<8x8xf32> to vector<8x8xbf16>
      %66 = vector.extract_strided_slice %59 {offsets = [0, 16], sizes = [8, 8], strides = [1, 1]} : vector<8x24xf32> to vector<8x8xf32>
      %67 = arith.truncf %66 : vector<8x8xf32> to vector<8x8xbf16>
      %cst_45 = arith.constant dense<0.000000e+00> : vector<8x8xf32>
      %68 = tpu.matmul %63, %65, %cst_45 {dimension_numbers = #tpu.dot_dimension_numbers<[1], [1], [0], [0], [0, 0, 1, 0], [], []>} : vector<8x8xbf16>, vector<8x8xbf16>, vector<8x8xf32> -> vector<8x8xf32>
      %cst_46 = arith.constant dense<0xFF800000> : vector<8xf32>
      %69 = vector.multi_reduction <maximumf>, %68, %cst_46 [1] : vector<8x8xf32> to vector<8xf32>
      %70 = vector.shape_cast %69 : vector<8xf32> to vector<8x1xf32>
      %71 = vector.broadcast %70 : vector<8x1xf32> to vector<8x8xf32>
      %72 = arith.subf %68, %71 : vector<8x8xf32>
      %73 = math.exp %72 : vector<8x8xf32>
      %cst_47 = arith.constant dense<0.000000e+00> : vector<8xf32>
      %74 = vector.multi_reduction <add>, %73, %cst_47 [1] : vector<8x8xf32> to vector<8xf32>
      %75 = vector.shape_cast %74 : vector<8xf32> to vector<8x1xf32>
      %76 = arith.truncf %73 : vector<8x8xf32> to vector<8x8xbf16>
      %cst_48 = arith.constant dense<0.000000e+00> : vector<8x8xf32>
      %77 = tpu.matmul %76, %67, %cst_48 {dimension_numbers = #tpu.dot_dimension_numbers<[1], [0], [0], [1], [0, 0, 1, 1], [], []>} : vector<8x8xbf16>, vector<8x8xbf16>, vector<8x8xf32> -> vector<8x8xf32>
      %78 = tpu.reciprocal %75 {approx = true} : vector<8x1xf32> -> vector<8x1xf32>
      %79 = vector.broadcast %78 : vector<8x1xf32> to vector<8x8xf32>
      %80 = arith.mulf %77, %79 : vector<8x8xf32>
      %81 = arith.truncf %80 : vector<8x8xf32> to vector<8x8xbf16>
      %82 = arith.index_cast %arg12 : i32 to index
      %c0_49 = arith.constant 0 : index
      %c0_50 = arith.constant 0 : index
      %83 = vector.load %arg10[%82, %c0_49, %c0_50] : memref<4x8x8xbf16, #tpu.memory_space<vmem>>, vector<1x8x8xbf16>
      %84 = vector.shape_cast %83 : vector<1x8x8xbf16> to vector<8x8xbf16>
      %85 = vector.shape_cast %81 : vector<8x8xbf16> to vector<1x8x8xbf16>
      tpu.vector_store %arg10[%82, %c0_49, %c0_50], %85 {strides = array<i32>} : memref<4x8x8xbf16, #tpu.memory_space<vmem>>, vector<1x8x8xbf16>,
    }
    %c4_i32_12 = arith.constant 4 : i32
    %c0_13 = arith.constant 0 : index
    %c0_14 = arith.constant 0 : index
    %c0_15 = arith.constant 0 : index
    %29 = vector.load %arg10[%c0_13, %c0_14, %c0_15] : memref<4x8x8xbf16, #tpu.memory_space<vmem>>, vector<1x8x8xbf16>
    %30 = vector.shape_cast %29 : vector<1x8x8xbf16> to vector<8x8xbf16>
    %c0_16 = arith.constant 0 : index
    %c0_17 = arith.constant 0 : index
    %31 = vector.load %arg11[%c0_16, %c0_17] : memref<8x32xbf16, #tpu.memory_space<vmem>>, vector<8x8xbf16>
    tpu.vector_store %arg11[%c0_16, %c0_17], %30 {strides = array<i32>} : memref<8x32xbf16, #tpu.memory_space<vmem>>, vector<8x8xbf16>,
    %c1 = arith.constant 1 : index
    %c0_18 = arith.constant 0 : index
    %c0_19 = arith.constant 0 : index
    %32 = vector.load %arg10[%c1, %c0_18, %c0_19] : memref<4x8x8xbf16, #tpu.memory_space<vmem>>, vector<1x8x8xbf16>
    %33 = vector.shape_cast %32 : vector<1x8x8xbf16> to vector<8x8xbf16>
    %c0_20 = arith.constant 0 : index
    %c8 = arith.constant 8 : index
    %34 = vector.load %arg11[%c0_20, %c8] : memref<8x32xbf16, #tpu.memory_space<vmem>>, vector<8x8xbf16>
    tpu.vector_store %arg11[%c0_20, %c8], %33 {strides = array<i32>} : memref<8x32xbf16, #tpu.memory_space<vmem>>, vector<8x8xbf16>,
    %c2 = arith.constant 2 : index
    %c0_21 = arith.constant 0 : index
    %c0_22 = arith.constant 0 : index
    %35 = vector.load %arg10[%c2, %c0_21, %c0_22] : memref<4x8x8xbf16, #tpu.memory_space<vmem>>, vector<1x8x8xbf16>
    %36 = vector.shape_cast %35 : vector<1x8x8xbf16> to vector<8x8xbf16>
    %c0_23 = arith.constant 0 : index
    %c16 = arith.constant 16 : index
    %37 = vector.load %arg11[%c0_23, %c16] : memref<8x32xbf16, #tpu.memory_space<vmem>>, vector<8x8xbf16>
    tpu.vector_store %arg11[%c0_23, %c16], %36 {strides = array<i32>} : memref<8x32xbf16, #tpu.memory_space<vmem>>, vector<8x8xbf16>,
    %c3 = arith.constant 3 : index
    %c0_24 = arith.constant 0 : index
    %c0_25 = arith.constant 0 : index
    %38 = vector.load %arg10[%c3, %c0_24, %c0_25] : memref<4x8x8xbf16, #tpu.memory_space<vmem>>, vector<1x8x8xbf16>
    %39 = vector.shape_cast %38 : vector<1x8x8xbf16> to vector<8x8xbf16>
    %c0_26 = arith.constant 0 : index
    %c24 = arith.constant 24 : index
    %40 = vector.load %arg11[%c0_26, %c24] : memref<8x32xbf16, #tpu.memory_space<vmem>>, vector<8x8xbf16>
    tpu.vector_store %arg11[%c0_26, %c24], %39 {strides = array<i32>} : memref<8x32xbf16, #tpu.memory_space<vmem>>, vector<8x8xbf16>,
    %c0_27 = arith.constant 0 : index
    %c0_28 = arith.constant 0 : index
    %41 = vector.load %arg11[%c0_27, %c0_28] : memref<8x32xbf16, #tpu.memory_space<vmem>>, vector<8x32xbf16>
    %c0_29 = arith.constant 0 : index
    %c0_30 = arith.constant 0 : index
    %42 = vector.load %arg6[%c0_29, %c0_30] : memref<32x32xbf16, #tpu.memory_space<vmem>>, vector<32x32xbf16>
    %cst_31 = arith.constant dense<0.000000e+00> : vector<8x32xf32>
    %43 = tpu.matmul %41, %42, %cst_31 {dimension_numbers = #tpu.dot_dimension_numbers<[1], [0], [0], [1], [0, 0, 1, 1], [], []>} : vector<8x32xbf16>, vector<32x32xbf16>, vector<8x32xf32> -> vector<8x32xf32>
    %c0_32 = arith.constant 0 : index
    %c0_33 = arith.constant 0 : index
    %44 = vector.load %arg7[%c0_32, %c0_33] : memref<1x32xf32, #tpu.memory_space<vmem>>, vector<1x32xf32>
    %45 = vector.broadcast %44 : vector<1x32xf32> to vector<8x32xf32>
    %46 = arith.addf %43, %45 : vector<8x32xf32>
    %c0_34 = arith.constant 0 : index
    %c0_35 = arith.constant 0 : index
    %c0_36 = arith.constant 0 : index
    %47 = vector.load %arg8[%c0_34, %c0_35, %c0_36] : memref<1x8x32xf32, #tpu.memory_space<vmem>>, vector<1x8x32xf32>
    %48 = vector.shape_cast %47 : vector<1x8x32xf32> to vector<8x32xf32>
    %49 = vector.shape_cast %46 : vector<8x32xf32> to vector<1x8x32xf32>
    tpu.vector_store %arg8[%c0_34, %c0_35, %c0_36], %49 {strides = array<i32>} : memref<1x8x32xf32, #tpu.memory_space<vmem>>, vector<1x8x32xf32>,
    return
  }
  func.func @transform_0(%arg0: i32) -> (i32, i32, i32) {
    %c0_i32 = arith.constant 0 : i32
    %c0_i32_0 = arith.constant 0 : i32
    %c0_i32_1 = arith.constant 0 : i32
    return %arg0, %c0_i32, %c0_i32_0 : i32, i32, i32
  }
  func.func @transform_1(%arg0: i32) -> (i32, i32) {
    %c0_i32 = arith.constant 0 : i32
    %c0_i32_0 = arith.constant 0 : i32
    %c0_i32_1 = arith.constant 0 : i32
    return %c0_i32, %c0_i32_0 : i32, i32
  }
  func.func @transform_2(%arg0: i32) -> (i32, i32) {
    %c0_i32 = arith.constant 0 : i32
    %c0_i32_0 = arith.constant 0 : i32
    %c0_i32_1 = arith.constant 0 : i32
    return %c0_i32, %c0_i32_0 : i32, i32
  }
  func.func @transform_3(%arg0: i32) -> (i32, i32, i32) {
    %c0_i32 = arith.constant 0 : i32
    %c0_i32_0 = arith.constant 0 : i32
    %c0_i32_1 = arith.constant 0 : i32
    %c0_i32_2 = arith.constant 0 : i32
    return %c0_i32, %c0_i32_0, %c0_i32_1 : i32, i32, i32
  }
  func.func @transform_4(%arg0: i32) -> (i32, i32, i32) {
    %c0_i32 = arith.constant 0 : i32
    %c0_i32_0 = arith.constant 0 : i32
    %c0_i32_1 = arith.constant 0 : i32
    %c0_i32_2 = arith.constant 0 : i32
    return %c0_i32, %c0_i32_0, %c0_i32_1 : i32, i32, i32
  }
  func.func @transform_5(%arg0: i32) -> (i32, i32) {
    %c0_i32 = arith.constant 0 : i32
    %c0_i32_0 = arith.constant 0 : i32
    %c0_i32_1 = arith.constant 0 : i32
    return %c0_i32, %c0_i32_0 : i32, i32
  }
  func.func @transform_6(%arg0: i32) -> (i32, i32) {
    %c0_i32 = arith.constant 0 : i32
    %c0_i32_0 = arith.constant 0 : i32
    %c0_i32_1 = arith.constant 0 : i32
    return %c0_i32, %c0_i32_0 : i32, i32
  }
  func.func @transform_7(%arg0: i32) -> (i32, i32, i32) {
    %c0_i32 = arith.constant 0 : i32
    %c0_i32_0 = arith.constant 0 : i32
    %c0_i32_1 = arith.constant 0 : i32
    return %arg0, %c0_i32, %c0_i32_0 : i32, i32, i32
  }
}

module attributes {stable_mosaic.version = 11 : i64} {
  func.func @_attn_subblock_kernel(%arg0: i32, %arg1: memref<1x8x32xf32, #tpu.memory_space<vmem>>, %arg2: memref<1x32xf32, #tpu.memory_space<vmem>>, %arg3: memref<1x32xf32, #tpu.memory_space<vmem>>, %arg4: memref<4x32x24xbf16, #tpu.memory_space<vmem>>, %arg5: memref<4x1x24xf32, #tpu.memory_space<vmem>>, %arg6: memref<32x32xbf16, #tpu.memory_space<vmem>>, %arg7: memref<1x32xf32, #tpu.memory_space<vmem>>, %arg8: memref<1x8x32xf32, #tpu.memory_space<vmem>>, %arg9: memref<8x32xbf16, #tpu.memory_space<vmem>>, %arg10: memref<4x8x8xbf16, #tpu.memory_space<vmem>>, %arg11: memref<8x32xbf16, #tpu.memory_space<vmem>>) attributes {dimension_semantics = [#tpu.dimension_semantics<parallel>], iteration_bounds = array<i64: 2>, scalar_prefetch = 0 : i64, scratch_operands = 3 : i64, tpu.core_type = #tpu.core_type<tc>, window_params = [{transform_indices = @transform_0, window_bounds = array<i64: 1, 8, 32>}, {pipeline_mode = #tpu.pipeline_mode<synchronous>, transform_indices = @transform_1, window_bounds = array<i64: 1, 32>}, {pipeline_mode = #tpu.pipeline_mode<synchronous>, transform_indices = @transform_2, window_bounds = array<i64: 1, 32>}, {pipeline_mode = #tpu.pipeline_mode<synchronous>, transform_indices = @transform_3, window_bounds = array<i64: 4, 32, 24>}, {pipeline_mode = #tpu.pipeline_mode<synchronous>, transform_indices = @transform_4, window_bounds = array<i64: 4, 1, 24>}, {pipeline_mode = #tpu.pipeline_mode<synchronous>, transform_indices = @transform_5, window_bounds = array<i64: 32, 32>}, {pipeline_mode = #tpu.pipeline_mode<synchronous>, transform_indices = @transform_6, window_bounds = array<i64: 1, 32>}, {transform_indices = @transform_7, window_bounds = array<i64: 1, 8, 32>}]} {
    %c0 = arith.constant 0 : index
    %c0_0 = arith.constant 0 : index
    %c0_1 = arith.constant 0 : index
    %0 = vector.load %arg1[%c0, %c0_0, %c0_1] : memref<1x8x32xf32, #tpu.memory_space<vmem>>, vector<1x8x32xf32>
    %1 = vector.shape_cast %0 : vector<1x8x32xf32> to vector<8x32xf32>
    %cst = arith.constant dense<0.000000e+00> : vector<8xf32>
    %2 = vector.multi_reduction <add>, %1, %cst [1] : vector<8x32xf32> to vector<8xf32>
    %3 = vector.shape_cast %2 : vector<8xf32> to vector<8x1xf32>
    %cst_2 = arith.constant 3.200000e+01 : f32
    %4 = vector.broadcast %cst_2 : f32 to vector<8x1xf32>
    %5 = arith.divf %3, %4 : vector<8x1xf32>
    %6 = vector.broadcast %5 : vector<8x1xf32> to vector<8x32xf32>
    %7 = arith.subf %1, %6 : vector<8x32xf32>
    %8 = arith.mulf %7, %7 : vector<8x32xf32>
    %cst_3 = arith.constant dense<0.000000e+00> : vector<8xf32>
    %9 = vector.multi_reduction <add>, %8, %cst_3 [1] : vector<8x32xf32> to vector<8xf32>
    %10 = vector.shape_cast %9 : vector<8xf32> to vector<8x1xf32>
    %cst_4 = arith.constant 3.200000e+01 : f32
    %11 = vector.broadcast %cst_4 : f32 to vector<8x1xf32>
    %12 = arith.divf %10, %11 : vector<8x1xf32>
    %13 = vector.broadcast %5 : vector<8x1xf32> to vector<8x32xf32>
    %14 = arith.subf %1, %13 : vector<8x32xf32>
    %cst_5 = arith.constant 9.99999997E-7 : f32
    %15 = vector.broadcast %cst_5 : f32 to vector<8x1xf32>
    %16 = arith.addf %12, %15 : vector<8x1xf32>
    %17 = math.rsqrt %16 : vector<8x1xf32>
    %18 = vector.broadcast %17 : vector<8x1xf32> to vector<8x32xf32>
    %19 = arith.mulf %14, %18 : vector<8x32xf32>
    %c0_6 = arith.constant 0 : index
    %c0_7 = arith.constant 0 : index
    %20 = vector.load %arg2[%c0_6, %c0_7] : memref<1x32xf32, #tpu.memory_space<vmem>>, vector<1x32xf32>
    %21 = vector.broadcast %20 : vector<1x32xf32> to vector<8x32xf32>
    %22 = arith.mulf %19, %21 : vector<8x32xf32>
    %c0_8 = arith.constant 0 : index
    %c0_9 = arith.constant 0 : index
    %23 = vector.load %arg3[%c0_8, %c0_9] : memref<1x32xf32, #tpu.memory_space<vmem>>, vector<1x32xf32>
    %24 = vector.broadcast %23 : vector<1x32xf32> to vector<8x32xf32>
    %25 = arith.addf %22, %24 : vector<8x32xf32>
    %26 = arith.truncf %25 : vector<8x32xf32> to vector<8x32xbf16>
    %c0_10 = arith.constant 0 : index
    %c0_11 = arith.constant 0 : index
    %27 = vector.load %arg9[%c0_10, %c0_11] : memref<8x32xbf16, #tpu.memory_space<vmem>>, vector<8x32xbf16>
    tpu.vector_store %arg9[%c0_10, %c0_11], %26 {strides = array<i32>} : memref<8x32xbf16, #tpu.memory_space<vmem>>, vector<8x32xbf16>,
    %c0_i32 = arith.constant 0 : i32
    %c4_i32 = arith.constant 4 : i32
    %28 = arith.addi %c0_i32, %c4_i32 : i32
    %c1_i32 = arith.constant 1 : i32
    scf.for %arg12 = %c0_i32 to %28 step %c1_i32  : i32 {
      %50 = arith.index_cast %arg12 : i32 to index
      %c0_37 = arith.constant 0 : index
      %c0_38 = arith.constant 0 : index
      %51 = vector.load %arg4[%50, %c0_37, %c0_38] : memref<4x32x24xbf16, #tpu.memory_space<vmem>>, vector<1x32x24xbf16>
      %52 = vector.shape_cast %51 : vector<1x32x24xbf16> to vector<32x24xbf16>
      %53 = arith.index_cast %arg12 : i32 to index
      %c0_39 = arith.constant 0 : index
      %c0_40 = arith.constant 0 : index
      %54 = vector.load %arg5[%53, %c0_39, %c0_40] : memref<4x1x24xf32, #tpu.memory_space<vmem>>, vector<1x1x24xf32>
      %55 = vector.shape_cast %54 : vector<1x1x24xf32> to vector<1x24xf32>
      %c0_41 = arith.constant 0 : index
      %c0_42 = arith.constant 0 : index
      %56 = vector.load %arg9[%c0_41, %c0_42] : memref<8x32xbf16, #tpu.memory_space<vmem>>, vector<8x32xbf16>
      %cst_43 = arith.constant dense<0.000000e+00> : vector<8x24xf32>
      %57 = tpu.matmul %56, %52, %cst_43 {dimension_numbers = #tpu.dot_dimension_numbers<[1], [0], [0], [1], [0, 0, 1, 1], [], []>} : vector<8x32xbf16>, vector<32x24xbf16>, vector<8x24xf32> -> vector<8x24xf32>
      %58 = vector.broadcast %55 : vector<1x24xf32> to vector<8x24xf32>
      %59 = arith.addf %57, %58 : vector<8x24xf32>
      %60 = vector.extract_strided_slice %59 {offsets = [0, 0], sizes = [8, 8], strides = [1, 1]} : vector<8x24xf32> to vector<8x8xf32>
      %cst_44 = arith.constant 0.353553385 : f32
      %61 = vector.broadcast %cst_44 : f32 to vector<8x8xf32>
      %62 = arith.mulf %60, %61 : vector<8x8xf32>
      %63 = arith.truncf %62 : vector<8x8xf32> to vector<8x8xbf16>
      %64 = vector.extract_strided_slice %59 {offsets = [0, 8], sizes = [8, 8], strides = [1, 1]} : vector<8x24xf32> to vector<8x8xf32>
      %65 = arith.truncf %64 : vector<8x8xf32> to vector<8x8xbf16>
      %66 = vector.extract_strided_slice %59 {offsets = [0, 16], sizes = [8, 8], strides = [1, 1]} : vector<8x24xf32> to vector<8x8xf32>
      %67 = arith.truncf %66 : vector<8x8xf32> to vector<8x8xbf16>
      %cst_45 = arith.constant dense<0.000000e+00> : vector<8x8xf32>
      %68 = tpu.matmul %63, %65, %cst_45 {dimension_numbers = #tpu.dot_dimension_numbers<[1], [1], [0], [0], [0, 0, 1, 0], [], []>} : vector<8x8xbf16>, vector<8x8xbf16>, vector<8x8xf32> -> vector<8x8xf32>
      %cst_46 = arith.constant dense<0xFF800000> : vector<8xf32>
      %69 = vector.multi_reduction <maximumf>, %68, %cst_46 [1] : vector<8x8xf32> to vector<8xf32>
      %70 = vector.shape_cast %69 : vector<8xf32> to vector<8x1xf32>
      %71 = vector.broadcast %70 : vector<8x1xf32> to vector<8x8xf32>
      %72 = arith.subf %68, %71 : vector<8x8xf32>
      %73 = math.exp %72 : vector<8x8xf32>
      %cst_47 = arith.constant dense<0.000000e+00> : vector<8xf32>
      %74 = vector.multi_reduction <add>, %73, %cst_47 [1] : vector<8x8xf32> to vector<8xf32>
      %75 = vector.shape_cast %74 : vector<8xf32> to vector<8x1xf32>
      %76 = arith.truncf %73 : vector<8x8xf32> to vector<8x8xbf16>
      %cst_48 = arith.constant dense<0.000000e+00> : vector<8x8xf32>
      %77 = tpu.matmul %76, %67, %cst_48 {dimension_numbers = #tpu.dot_dimension_numbers<[1], [0], [0], [1], [0, 0, 1, 1], [], []>} : vector<8x8xbf16>, vector<8x8xbf16>, vector<8x8xf32> -> vector<8x8xf32>
      %78 = tpu.reciprocal %75 {approx = true} : vector<8x1xf32> -> vector<8x1xf32>
      %79 = vector.broadcast %78 : vector<8x1xf32> to vector<8x8xf32>
      %80 = arith.mulf %77, %79 : vector<8x8xf32>
      %81 = arith.truncf %80 : vector<8x8xf32> to vector<8x8xbf16>
      %82 = arith.index_cast %arg12 : i32 to index
      %c0_49 = arith.constant 0 : index
      %c0_50 = arith.constant 0 : index
      %83 = vector.load %arg10[%82, %c0_49, %c0_50] : memref<4x8x8xbf16, #tpu.memory_space<vmem>>, vector<1x8x8xbf16>
      %84 = vector.shape_cast %83 : vector<1x8x8xbf16> to vector<8x8xbf16>
      %85 = vector.shape_cast %81 : vector<8x8xbf16> to vector<1x8x8xbf16>
      tpu.vector_store %arg10[%82, %c0_49, %c0_50], %85 {strides = array<i32>} : memref<4x8x8xbf16, #tpu.memory_space<vmem>>, vector<1x8x8xbf16>,
    }
    %c4_i32_12 = arith.constant 4 : i32
    %c0_13 = arith.constant 0 : index
    %c0_14 = arith.constant 0 : index
    %c0_15 = arith.constant 0 : index
    %29 = vector.load %arg10[%c0_13, %c0_14, %c0_15] : memref<4x8x8xbf16, #tpu.memory_space<vmem>>, vector<1x8x8xbf16>
    %30 = vector.shape_cast %29 : vector<1x8x8xbf16> to vector<8x8xbf16>
    %c0_16 = arith.constant 0 : index
    %c0_17 = arith.constant 0 : index
    %31 = vector.load %arg11[%c0_16, %c0_17] : memref<8x32xbf16, #tpu.memory_space<vmem>>, vector<8x8xbf16>
    tpu.vector_store %arg11[%c0_16, %c0_17], %30 {strides = array<i32>} : memref<8x32xbf16, #tpu.memory_space<vmem>>, vector<8x8xbf16>,
    %c1 = arith.constant 1 : index
    %c0_18 = arith.constant 0 : index
    %c0_19 = arith.constant 0 : index
    %32 = vector.load %arg10[%c1, %c0_18, %c0_19] : memref<4x8x8xbf16, #tpu.memory_space<vmem>>, vector<1x8x8xbf16>
    %33 = vector.shape_cast %32 : vector<1x8x8xbf16> to vector<8x8xbf16>
    %c0_20 = arith.constant 0 : index
    %c8 = arith.constant 8 : index
    %34 = vector.load %arg11[%c0_20, %c8] : memref<8x32xbf16, #tpu.memory_space<vmem>>, vector<8x8xbf16>
    tpu.vector_store %arg11[%c0_20, %c8], %33 {strides = array<i32>} : memref<8x32xbf16, #tpu.memory_space<vmem>>, vector<8x8xbf16>,
    %c2 = arith.constant 2 : index
    %c0_21 = arith.constant 0 : index
    %c0_22 = arith.constant 0 : index
    %35 = vector.load %arg10[%c2, %c0_21, %c0_22] : memref<4x8x8xbf16, #tpu.memory_space<vmem>>, vector<1x8x8xbf16>
    %36 = vector.shape_cast %35 : vector<1x8x8xbf16> to vector<8x8xbf16>
    %c0_23 = arith.constant 0 : index
    %c16 = arith.constant 16 : index
    %37 = vector.load %arg11[%c0_23, %c16] : memref<8x32xbf16, #tpu.memory_space<vmem>>, vector<8x8xbf16>
    tpu.vector_store %arg11[%c0_23, %c16], %36 {strides = array<i32>} : memref<8x32xbf16, #tpu.memory_space<vmem>>, vector<8x8xbf16>,
    %c3 = arith.constant 3 : index
    %c0_24 = arith.constant 0 : index
    %c0_25 = arith.constant 0 : index
    %38 = vector.load %arg10[%c3, %c0_24, %c0_25] : memref<4x8x8xbf16, #tpu.memory_space<vmem>>, vector<1x8x8xbf16>
    %39 = vector.shape_cast %38 : vector<1x8x8xbf16> to vector<8x8xbf16>
    %c0_26 = arith.constant 0 : index
    %c24 = arith.constant 24 : index
    %40 = vector.load %arg11[%c0_26, %c24] : memref<8x32xbf16, #tpu.memory_space<vmem>>, vector<8x8xbf16>
    tpu.vector_store %arg11[%c0_26, %c24], %39 {strides = array<i32>} : memref<8x32xbf16, #tpu.memory_space<vmem>>, vector<8x8xbf16>,
    %c0_27 = arith.constant 0 : index
    %c0_28 = arith.constant 0 : index
    %41 = vector.load %arg11[%c0_27, %c0_28] : memref<8x32xbf16, #tpu.memory_space<vmem>>, vector<8x32xbf16>
    %c0_29 = arith.constant 0 : index
    %c0_30 = arith.constant 0 : index
    %42 = vector.load %arg6[%c0_29, %c0_30] : memref<32x32xbf16, #tpu.memory_space<vmem>>, vector<32x32xbf16>
    %cst_31 = arith.constant dense<0.000000e+00> : vector<8x32xf32>
    %43 = tpu.matmul %41, %42, %cst_31 {dimension_numbers = #tpu.dot_dimension_numbers<[1], [0], [0], [1], [0, 0, 1, 1], [], []>} : vector<8x32xbf16>, vector<32x32xbf16>, vector<8x32xf32> -> vector<8x32xf32>
    %c0_32 = arith.constant 0 : index
    %c0_33 = arith.constant 0 : index
    %44 = vector.load %arg7[%c0_32, %c0_33] : memref<1x32xf32, #tpu.memory_space<vmem>>, vector<1x32xf32>
    %45 = vector.broadcast %44 : vector<1x32xf32> to vector<8x32xf32>
    %46 = arith.addf %43, %45 : vector<8x32xf32>
    %c0_34 = arith.constant 0 : index
    %c0_35 = arith.constant 0 : index
    %c0_36 = arith.constant 0 : index
    %47 = vector.load %arg8[%c0_34, %c0_35, %c0_36] : memref<1x8x32xf32, #tpu.memory_space<vmem>>, vector<1x8x32xf32>
    %48 = vector.shape_cast %47 : vector<1x8x32xf32> to vector<8x32xf32>
    %49 = vector.shape_cast %46 : vector<8x32xf32> to vector<1x8x32xf32>
    tpu.vector_store %arg8[%c0_34, %c0_35, %c0_36], %49 {strides = array<i32>} : memref<1x8x32xf32, #tpu.memory_space<vmem>>, vector<1x8x32xf32>,
    return
  }
  func.func @transform_0(%arg0: i32) -> (i32, i32, i32) {
    %c0_i32 = arith.constant 0 : i32
    %c0_i32_0 = arith.constant 0 : i32
    %c0_i32_1 = arith.constant 0 : i32
    return %arg0, %c0_i32, %c0_i32_0 : i32, i32, i32
  }
  func.func @transform_1(%arg0: i32) -> (i32, i32) {
    %c0_i32 = arith.constant 0 : i32
    %c0_i32_0 = arith.constant 0 : i32
    %c0_i32_1 = arith.constant 0 : i32
    return %c0_i32, %c0_i32_0 : i32, i32
  }
  func.func @transform_2(%arg0: i32) -> (i32, i32) {
    %c0_i32 = arith.constant 0 : i32
    %c0_i32_0 = arith.constant 0 : i32
    %c0_i32_1 = arith.constant 0 : i32
    return %c0_i32, %c0_i32_0 : i32, i32
  }
  func.func @transform_3(%arg0: i32) -> (i32, i32, i32) {
    %c0_i32 = arith.constant 0 : i32
    %c0_i32_0 = arith.constant 0 : i32
    %c0_i32_1 = arith.constant 0 : i32
    %c0_i32_2 = arith.constant 0 : i32
    return %c0_i32, %c0_i32_0, %c0_i32_1 : i32, i32, i32
  }
  func.func @transform_4(%arg0: i32) -> (i32, i32, i32) {
    %c0_i32 = arith.constant 0 : i32
    %c0_i32_0 = arith.constant 0 : i32
    %c0_i32_1 = arith.constant 0 : i32
    %c0_i32_2 = arith.constant 0 : i32
    return %c0_i32, %c0_i32_0, %c0_i32_1 : i32, i32, i32
  }
  func.func @transform_5(%arg0: i32) -> (i32, i32) {
    %c0_i32 = arith.constant 0 : i32
    %c0_i32_0 = arith.constant 0 : i32
    %c0_i32_1 = arith.constant 0 : i32
    return %c0_i32, %c0_i32_0 : i32, i32
  }
  func.func @transform_6(%arg0: i32) -> (i32, i32) {
    %c0_i32 = arith.constant 0 : i32
    %c0_i32_0 = arith.constant 0 : i32
    %c0_i32_1 = arith.constant 0 : i32
    return %c0_i32, %c0_i32_0 : i32, i32
  }
  func.func @transform_7(%arg0: i32) -> (i32, i32, i32) {
    %c0_i32 = arith.constant 0 : i32
    %c0_i32_0 = arith.constant 0 : i32
    %c0_i32_1 = arith.constant 0 : i32
    return %arg0, %c0_i32, %c0_i32_0 : i32, i32, i32
  }
}

</mosaic_0001>

<llo_original>
// kernel: tpu_custom_call.1
$region0: #{tpu_custom_call.1}
  #allocation0 [shape = 'u32[]', space=smem, size = 0x4, offset = 0x4, fixed_abs, tag = 'smem constant byte address 0x4 - core index']
  #allocation1 [shape = 'u32[72,128]{1,0:T(1,128)}', space=vmem, size = 0x9000, scoped, tag = 'internal scratch']
  #allocation2 [shape = 'bf16[8,32]{1,0:T(8,128)(2,1)}', space=vmem, size = 0x800, scoped, tag = 'scratch operand']
  #allocation3 [shape = 'bf16[4,8,8]{2,1,0:T(8,128)(2,1)}', space=vmem, size = 0x2000, scoped, tag = 'scratch operand']
  #allocation4 [shape = 'bf16[8,32]{1,0:T(8,128)(2,1)}', space=vmem, size = 0x800, scoped, tag = 'scratch operand']
  %s0 = inlined_call_operand.vmem [shape: f32[2,8,32], index: 0, kind: input, shape index: {}]
  %s1 = inlined_call_operand.vmem [shape: f32[1,32], index: 1, kind: input, shape index: {}]
  %s2 = inlined_call_operand.vmem [shape: f32[1,32], index: 2, kind: input, shape index: {}]
  %s3 = inlined_call_operand.vmem [shape: bf16[4,32,24], index: 3, kind: input, shape index: {}]
  %s4 = inlined_call_operand.vmem [shape: f32[4,1,24], index: 4, kind: input, shape index: {}]
  %s5 = inlined_call_operand.vmem [shape: bf16[32,32], index: 5, kind: input, shape index: {}]
  %s6 = inlined_call_operand.vmem [shape: f32[1,32], index: 6, kind: input, shape index: {}]
  %s7 = inlined_call_operand.hbm [shape: f32[2,8,32], index: 7, kind: output, shape index: {}]
  %s8 = sld [smem:[#allocation0]]
  $region68: #{tpu_custom_call.1} parent=0
    _
  %s10 = ssub.s32 1, %s8
  %s11 = scalar_select 0, %s10, %s8
  $region1: #{tpu_custom_call.1} parent=0
    #allocation5 [shape = 'u8[8192]{0}', space=vmem, size = 0x2000, scoped, tag = 'output window, operand 0']
    #allocation6 [shape = 's32[2]{0}', space=sflag, size = 0x8, scoped, tag = 'scoped memory for tpu_custom_call.1']
    %12 = vsyncpa [#allocation6], 0
    %s13 = scalar_lea.sflag [#allocation6], 1
    %14 = vsyncpa %s13, 0
    loop: start=0, step=1, limit=4
    $region2: #{tpu_custom_call.1} parent=1 // loop_pre_header
      _
    $region3: #{tpu_custom_call.1} parent=1 // loop_header
      %s16 = sphi 0, %s20
      %p17 = scmp.ge.s32.totalorder %s16, 4
      %s26 = sphi 0, %s28
      %s29 = sphi 0, %s26
      %s30 = sphi 0, %s29
      %s46 = sphi 0, %s30
      %s50 = sphi 0, %s50
      %s52 = sphi 0, %s50
      %s53 = sphi 0, %s52
      %s67 = sphi 0, %s53
      %s71 = sphi 0, %s71
      %s73 = sphi 0, %s71
      %s74 = sphi 0, %s73
      %s88 = sphi 0, %s74
      %s92 = sphi 0, %s92
      %s94 = sphi 0, %s92
      %s95 = sphi 0, %s94
      %s109 = sphi 0, %s95
      %s113 = sphi 0, %s113
      %s115 = sphi 0, %s113
      %s116 = sphi 0, %s115
      %s130 = sphi 0, %s116
      %s134 = sphi 0, %s134
      %s136 = sphi 0, %s134
      %s137 = sphi 0, %s136
      %s151 = sphi 0, %s137
      %s155 = sphi 0, %s155
      %s157 = sphi 0, %s155
      %s158 = sphi 0, %s157
      %s172 = sphi 0, %s158
      %s178 = sphi 0, %s180
      %s181 = sphi 0, %s178
      %s182 = sphi 0, %s181
      %s198 = sphi 0, %s182
    $region4: #{tpu_custom_call.1} parent=1 // loop_header_branch
      %19 = sbr.rel (%p17) target = $region8
    $region5: #{tpu_custom_call.1} parent=1 // loop_body
      %s21 = ssub.s32 %s16, 1
      %s22 = ssub.s32 %s16, 2
      %s23 = sadd.s32 %s16, 1
      %s24 = ssub.s32 %s16, %s23
      %p25 = scmp.eq.s32.totalorder %s24, 0
      %s27 = sadd.s32 %s26, 1
      %s28 = scalar_select %p25, %s26, %s27
      %p31 = pneg %p25
      %p32 = scmp.eq.s32.totalorder %s16, 1
      %p33 = por %p31, %p32
      %p34 = scmp.ne.s32.totalorder %s26, %s29
      %p35 = scmp.eq.s32.totalorder %s16, 0
      %p36 = por %p34, %p35
      %p37 = scmp.ne.s32.totalorder %s26, %s29
      %p38 = scmp.eq.s32.totalorder %s21, 1
      %p39 = por %p37, %p38
      %p40 = scmp.ne.s32.totalorder %s29, %s30
      %p41 = scmp.eq.s32.totalorder %s21, 0
      %p42 = por %p40, %p41
      %p43 = scmp.ne.s32.totalorder %s29, %s30
      %p44 = scmp.eq.s32.totalorder %s22, 1
      %p45 = por %p43, %p44
      %p47 = scmp.ne.s32.totalorder %s30, %s46
      %p48 = scmp.eq.s32.totalorder %s22, 0
      %p49 = por %p47, %p48
      %s51 = sadd.s32 %s50, 1
      %p54 = scmp.eq.s32.totalorder %s16, 1
      %p55 = scmp.ne.s32.totalorder %s50, %s52
      %p56 = scmp.eq.s32.totalorder %s16, 0
      %p57 = por %p55, %p56
      %p58 = scmp.ne.s32.totalorder %s50, %s52
      %p59 = scmp.eq.s32.totalorder %s21, 1
      %p60 = por %p58, %p59
      %p61 = scmp.ne.s32.totalorder %s52, %s53
      %p62 = scmp.eq.s32.totalorder %s21, 0
      %p63 = por %p61, %p62
      %p64 = scmp.ne.s32.totalorder %s52, %s53
      %p65 = scmp.eq.s32.totalorder %s22, 1
      %p66 = por %p64, %p65
      %p68 = scmp.ne.s32.totalorder %s53, %s67
      %p69 = scmp.eq.s32.totalorder %s22, 0
      %p70 = por %p68, %p69
      %s72 = sadd.s32 %s71, 1
      %p75 = scmp.eq.s32.totalorder %s16, 1
      %p76 = scmp.ne.s32.totalorder %s71, %s73
      %p77 = scmp.eq.s32.totalorder %s16, 0
      %p78 = por %p76, %p77
      %p79 = scmp.ne.s32.totalorder %s71, %s73
      %p80 = scmp.eq.s32.totalorder %s21, 1
      %p81 = por %p79, %p80
      %p82 = scmp.ne.s32.totalorder %s73, %s74
      %p83 = scmp.eq.s32.totalorder %s21, 0
      %p84 = por %p82, %p83
      %p85 = scmp.ne.s32.totalorder %s73, %s74
      %p86 = scmp.eq.s32.totalorder %s22, 1
      %p87 = por %p85, %p86
      %p89 = scmp.ne.s32.totalorder %s74, %s88
      %p90 = scmp.eq.s32.totalorder %s22, 0
      %p91 = por %p89, %p90
      %s93 = sadd.s32 %s92, 1
      %p96 = scmp.eq.s32.totalorder %s16, 1
      %p97 = scmp.ne.s32.totalorder %s92, %s94
      %p98 = scmp.eq.s32.totalorder %s16, 0
      %p99 = por %p97, %p98
      %p100 = scmp.ne.s32.totalorder %s92, %s94
      %p101 = scmp.eq.s32.totalorder %s21, 1
      %p102 = por %p100, %p101
      %p103 = scmp.ne.s32.totalorder %s94, %s95
      %p104 = scmp.eq.s32.totalorder %s21, 0
      %p105 = por %p103, %p104
      %p106 = scmp.ne.s32.totalorder %s94, %s95
      %p107 = scmp.eq.s32.totalorder %s22, 1
      %p108 = por %p106, %p107
      %p110 = scmp.ne.s32.totalorder %s95, %s109
      %p111 = scmp.eq.s32.totalorder %s22, 0
      %p112 = por %p110, %p111
      %s114 = sadd.s32 %s113, 1
      %p117 = scmp.eq.s32.totalorder %s16, 1
      %p118 = scmp.ne.s32.totalorder %s113, %s115
      %p119 = scmp.eq.s32.totalorder %s16, 0
      %p120 = por %p118, %p119
      %p121 = scmp.ne.s32.totalorder %s113, %s115
      %p122 = scmp.eq.s32.totalorder %s21, 1
      %p123 = por %p121, %p122
      %p124 = scmp.ne.s32.totalorder %s115, %s116
      %p125 = scmp.eq.s32.totalorder %s21, 0
      %p126 = por %p124, %p125
      %p127 = scmp.ne.s32.totalorder %s115, %s116
      %p128 = scmp.eq.s32.totalorder %s22, 1
      %p129 = por %p127, %p128
      %p131 = scmp.ne.s32.totalorder %s116, %s130
      %p132 = scmp.eq.s32.totalorder %s22, 0
      %p133 = por %p131, %p132
      %s135 = sadd.s32 %s134, 1
      %p138 = scmp.eq.s32.totalorder %s16, 1
      %p139 = scmp.ne.s32.totalorder %s134, %s136
      %p140 = scmp.eq.s32.totalorder %s16, 0
      %p141 = por %p139, %p140
      %p142 = scmp.ne.s32.totalorder %s134, %s136
      %p143 = scmp.eq.s32.totalorder %s21, 1
      %p144 = por %p142, %p143
      %p145 = scmp.ne.s32.totalorder %s136, %s137
      %p146 = scmp.eq.s32.totalorder %s21, 0
      %p147 = por %p145, %p146
      %p148 = scmp.ne.s32.totalorder %s136, %s137
      %p149 = scmp.eq.s32.totalorder %s22, 1
      %p150 = por %p148, %p149
      %p152 = scmp.ne.s32.totalorder %s137, %s151
      %p153 = scmp.eq.s32.totalorder %s22, 0
      %p154 = por %p152, %p153
      %s156 = sadd.s32 %s155, 1
      %p159 = scmp.eq.s32.totalorder %s16, 1
      %p160 = scmp.ne.s32.totalorder %s155, %s157
      %p161 = scmp.eq.s32.totalorder %s16, 0
      %p162 = por %p160, %p161
      %p163 = scmp.ne.s32.totalorder %s155, %s157
      %p164 = scmp.eq.s32.totalorder %s21, 1
      %p165 = por %p163, %p164
      %p166 = scmp.ne.s32.totalorder %s157, %s158
      %p167 = scmp.eq.s32.totalorder %s21, 0
      %p168 = por %p166, %p167
      %p169 = scmp.ne.s32.totalorder %s157, %s158
      %p170 = scmp.eq.s32.totalorder %s22, 1
      %p171 = por %p169, %p170
      %p173 = scmp.ne.s32.totalorder %s158, %s172
      %p174 = scmp.eq.s32.totalorder %s22, 0
      %p175 = por %p173, %p174
      %s176 = ssub.s32 %s16, %s23
      %p177 = scmp.eq.s32.totalorder %s176, 0
      %s179 = sadd.s32 %s178, 1
      %s180 = scalar_select %p177, %s178, %s179
      %p183 = pneg %p177
      %p184 = scmp.eq.s32.totalorder %s16, 1
      %p185 = por %p183, %p184
      %p186 = scmp.ne.s32.totalorder %s178, %s181
      %p187 = scmp.eq.s32.totalorder %s16, 0
      %p188 = por %p186, %p187
      %p189 = scmp.ne.s32.totalorder %s178, %s181
      %p190 = scmp.eq.s32.totalorder %s21, 1
      %p191 = por %p189, %p190
      %p192 = scmp.ne.s32.totalorder %s181, %s182
      %p193 = scmp.eq.s32.totalorder %s21, 0
      %p194 = por %p192, %p193
      %p195 = scmp.ne.s32.totalorder %s181, %s182
      %p196 = scmp.eq.s32.totalorder %s22, 1
      %p197 = por %p195, %p196
      %p199 = scmp.ne.s32.totalorder %s182, %s198
      %p200 = scmp.eq.s32.totalorder %s22, 0
      %p201 = por %p199, %p200
      %p202 = scmp.le.s32.totalorder 1, %s16
      %p203 = scmp.lt.s32.totalorder %s16, 3
      %p204 = pnand %p202, %p203
      %p205 = pneg %p204
      // Predicated region
      $region9: #{tpu_custom_call.1} parent=5 // pred_check
        _
      $region10: #{tpu_custom_call.1} parent=5 // pred_check_branch
        %207 = sbr.rel (%p204) target = $region12
      $region11: #{tpu_custom_call.1} parent=5 // pred_region
        %s208 = ssub.s32 %s16, 1
        // Predicated region
        $region13: #{tpu_custom_call.1} parent=11 // pred_check
          %p209 = pneg %p63
        $region14: #{tpu_custom_call.1} parent=11 // pred_check_branch
          %211 = sbr.rel (%p209) target = $region16
        $region15: #{tpu_custom_call.1} parent=11 // pred_region
          _
        $region16: #{tpu_custom_call.1} parent=11 // pred_fallthru
          _
        // Predicated region
        $region17: #{tpu_custom_call.1} parent=11 // pred_check
          %p212 = pneg %p84
        $region18: #{tpu_custom_call.1} parent=11 // pred_check_branch
          %214 = sbr.rel (%p212) target = $region20
        $region19: #{tpu_custom_call.1} parent=11 // pred_region
          _
        $region20: #{tpu_custom_call.1} parent=11 // pred_fallthru
          _
        // Predicated region
        $region21: #{tpu_custom_call.1} parent=11 // pred_check
          %p215 = pneg %p105
        $region22: #{tpu_custom_call.1} parent=11 // pred_check_branch
          %217 = sbr.rel (%p215) target = $region24
        $region23: #{tpu_custom_call.1} parent=11 // pred_region
          _
        $region24: #{tpu_custom_call.1} parent=11 // pred_fallthru
          _
        // Predicated region
        $region25: #{tpu_custom_call.1} parent=11 // pred_check
          %p218 = pneg %p126
        $region26: #{tpu_custom_call.1} parent=11 // pred_check_branch
          %220 = sbr.rel (%p218) target = $region28
        $region27: #{tpu_custom_call.1} parent=11 // pred_region
          _
        $region28: #{tpu_custom_call.1} parent=11 // pred_fallthru
          _
        // Predicated region
        $region29: #{tpu_custom_call.1} parent=11 // pred_check
          %p221 = pneg %p147
        $region30: #{tpu_custom_call.1} parent=11 // pred_check_branch
          %223 = sbr.rel (%p221) target = $region32
        $region31: #{tpu_custom_call.1} parent=11 // pred_region
          _
        $region32: #{tpu_custom_call.1} parent=11 // pred_fallthru
          _
        // Predicated region
        $region33: #{tpu_custom_call.1} parent=11 // pred_check
          %p224 = pneg %p168
        $region34: #{tpu_custom_call.1} parent=11 // pred_check_branch
          %226 = sbr.rel (%p224) target = $region36
        $region35: #{tpu_custom_call.1} parent=11 // pred_region
          _
        $region36: #{tpu_custom_call.1} parent=11 // pred_fallthru
          _
      $region12: #{tpu_custom_call.1} parent=5 // pred_fallthru
        _
      %p227 = scmp.lt.s32.totalorder %s16, 2
      // Predicated region
      $region37: #{tpu_custom_call.1} parent=5 // pred_check
        %p228 = pneg %p227
      $region38: #{tpu_custom_call.1} parent=5 // pred_check_branch
        %230 = sbr.rel (%p228) target = $region40
      $region39: #{tpu_custom_call.1} parent=5 // pred_region
        // Predicated region
        $region41: #{tpu_custom_call.1} parent=39 // pred_check
          %p231 = pneg %p36
        $region42: #{tpu_custom_call.1} parent=39 // pred_check_branch
          %233 = sbr.rel (%p231) target = $region44
        $region43: #{tpu_custom_call.1} parent=39 // pred_region
          %p234 = scmp.lt.s32.totalorder %s16, 1
          %s235 = scalar_select %p234, %s16, 1
          %s236 = smul.addr %s235, 8
          %s237 = scalar_lea.vmem %s0, %s236
        $region44: #{tpu_custom_call.1} parent=39 // pred_fallthru
          _
      $region40: #{tpu_custom_call.1} parent=5 // pred_fallthru
        _
      %p238 = scmp.le.s32.totalorder 1, %s16
      %p239 = scmp.lt.s32.totalorder %s16, 3
      %p240 = pnand %p238, %p239
      %p241 = pneg %p240
      // Predicated region
      $region45: #{tpu_custom_call.1} parent=5 // pred_check
        _
      $region46: #{tpu_custom_call.1} parent=5 // pred_check_branch
        %243 = sbr.rel (%p240) target = $region48
      $region47: #{tpu_custom_call.1} parent=5 // pred_region
        %s244 = ssub.s32 %s16, 1
        %p245 = scmp.lt.s32.totalorder %s21, 1
        %s246 = scalar_select %p245, %s21, 1
        %s247 = smul.addr %s246, 8
        %s248 = scalar_lea.vmem %s0, %s247
        %p249 = pneg %p42
        %p250 = pneg %p39
        %p251 = pneg %p63
        %p252 = pneg %p60
        %p253 = pneg %p84
        %p254 = pneg %p81
        %p255 = pneg %p105
        %p256 = pneg %p102
        %p257 = pneg %p126
        %p258 = pneg %p123
        %p259 = pneg %p147
        %p260 = pneg %p144
        %p261 = pneg %p168
        %p262 = pneg %p165
        %p263 = pneg %p194
        %p264 = pneg %p191
        %s265 = sand.u32 %s181, 1
        %s266 = scalar_lea.sflag [#allocation6], %s265
        %s267 = sand.u32 %s181, 1
        %s268 = smul.addr %s267, 8
        %s269 = scalar_lea.vmem [#allocation5], %s268
        %p270 = scmp.lt.s32.totalorder %s21, 1
        %s271 = scalar_select %p270, %s21, 1
        %s272 = smul.addr %s271, 8
        %s273 = scalar_lea.vmem %s0, %s272
        %v275 = vld [vmem:[%s273] sm:$0xff]
        %vm276 = vcmask 261120
        %v277 = vsel %vm276, %v275, 0.0
        %278 = vadd.xlane.f32.xlu0 %v277
        %v279 = vpop.xlane.xlu0 %278
        %v280 = vrcp.pop 32.0
        %v281 = vmul.f32 32.0, %v280
        %v282 = vsub.f32 1.0, %v281
        %v283 = vmul.f32 %v280, %v282
        %v284 = vadd.f32 %v280, %v283
        %vm285 = vweird.f32 %v280
        %v286 = vsel %vm285, %v280, %v284
        %v287 = vmul.f32 %v279, %v286
        %v288 = vsub.f32 %v275, %v287
        %v289 = vmul.f32 %v288, %v288
        %v290 = vsel %vm276, %v289, 0.0
        %291 = vadd.xlane.f32.xlu0 %v290
        %v292 = vpop.xlane.xlu0 %291
        %v293 = vmul.f32 %v292, %v286
        %v294 = vadd.f32 %v293, 1e-06
        %v295 = vrsqrt.pop %v294
        %v296 = vmul.f32 %v295, %v294
        %v297 = vmul.f32 %v296, %v295
        %v298 = vmul.f32 0.5, %v297
        %v299 = vsub.f32 1.5, %v298
        %v300 = vmul.f32 %v295, %v299
        %vm301 = vweird.f32 %v294
        %vm302 = vweird.f32 %v295
        %vm303 = vmor %vm301, %vm302
        %v304 = vsel %vm303, %v295, %v300
        %v305 = vmul.f32 %v288, %v304
        %v306 = vld [vmem:[%s1] sm:$0x1]
        %v308 = vperm.slane %v306, 0
        %v310 = vmul.f32 %v305, %v308
        %v311 = vld [vmem:[%s2] sm:$0x1]
        %v313 = vperm.slane %v311, 0
        %v315 = vadd.f32 %v310, %v313
        %v316 = vpack.c.bf16 %v315, %v315
        %vm317 = vcmask 257024
        %318 = vst.msk [vmem:[#allocation2] sm:$0xf] %vm317, %v316
        loop: start=0, step=1, limit=4
        $region49: #{tpu_custom_call.1} parent=47 // loop_pre_header
          _
        $region50: #{tpu_custom_call.1} parent=47 // loop_header
          %s320 = sphi 0, %s324
          %p321 = scmp.ge.s32.totalorder %s320, 4
        $region51: #{tpu_custom_call.1} parent=47 // loop_header_branch
          %323 = sbr.rel (%p321) target = $region55
        $region52: #{tpu_custom_call.1} parent=47 // loop_body
          %s325 = smul.u32 %s320, 4
          %s326 = smul.addr %s325, 4
          %s327 = scalar_lea.vmem %s3, %s326
          %v328 = vld [vmem:[%s327] sm:$0xf]
          %v329 = vld [vmem:[%s327 + $0x4] sm:$0xf]
          %v330 = vld [vmem:[%s327 + $0x8] sm:$0xf]
          %v331 = vld [vmem:[%s327 + $0xc] sm:$0xf]
          %s332 = scalar_lea.vmem %s4, %s320
          %v333 = vld [vmem:[%s332] sm:$0x1]
          %v334 = vld [vmem:[#allocation2] sm:$0xf]
          %v336 = vperm.slane %v333, 0
          %v342 = vunpack.c.l.b16 %v328
          %v343 = vunpack.c.l.b16 %v329
          %v344 = vunpack.c.l.b16 %v330
          %v345 = vunpack.c.l.b16 %v331
          %v346 = vpack.c.b16 %v343, %v342
          %v347 = vpack.c.b16 %v345, %v344
          %v351 = vsel %vm276, %v334, 0
          %353 = vmatpush.bf16.msra.mxu0 0
          %354 = vmatpush.bf16.msra.mxu0 0
          %355 = vmatpush.bf16.msra.mxu0 0
          %356 = vmatpush.bf16.msra.mxu0 0
          %357 = vmatpush.bf16.msra.mxu0 0
          %358 = vmatpush.bf16.msra.mxu0 0
          %359 = vmatpush.bf16.msra.mxu0 %v347
          %360 = vmatpush.bf16.msra.mxu0 %v346
          %361 = vmatmul.bf16.gmra.mxu0 %v351
          %v362 = vpop.f32.mrf.mxu0
          %v363 = vadd.f32 %v336, %v362
          %v364 = vpop.f32.mrf.mxu0
          %365 = vdwg.mxu0
          %v366 = vmul.f32 %v363, 0.35355338
          %v367 = vpack.c.bf16 %v366, %v366
          %v368 = vpack.c.bf16 %v363, %v363
          %370 = vrot.lane.b32.xlu0 %v368, 120
          %v371 = vpop.permute.xlu0 %370
          %vm372 = vcmask 64512
          %v374 = vsel %vm372, %v367, 0
          %v377 = vsel %vm372, %v371, 0
          %379 = vmatpush.bf16.xpose.msra.mxu0 0
          %380 = vmatpush.bf16.xpose.msra.mxu0 0
          %381 = vmatpush.bf16.xpose.msra.mxu0 0
          %382 = vmatpush.bf16.xpose.msra.mxu0 0
          %383 = vmatpush.bf16.xpose.msra.mxu0 0
          %384 = vmatpush.bf16.xpose.msra.mxu0 0
          %385 = vmatpush.bf16.xpose.msra.mxu0 0
          %386 = vmatpush.bf16.xpose.msra.mxu0 %v377
          %387 = vmatmul.bf16.gmra.mxu0 %v374
          %v388 = vpop.f32.mrf.mxu0
          %v389 = vadd.f32 0.0, %v388
          %v390 = vpop.f32.mrf.mxu0
          %391 = vdwg.mxu0
          %v392 = vsel %vm372, %v389, -inf
          %393 = vmax.xlane.f32.xlu0 %v392
          %v394 = vpop.xlane.xlu0 %393
          %v395 = vsub.f32 %v389, %v394
          %v396 = vmul.f32 %v395, 1.442695
          %v397 = vpow.pop %v396
          %v398 = vsel %vm372, %v397, 0.0
          %399 = vadd.xlane.f32.xlu0 %v398
          %v400 = vpop.xlane.xlu0 %399
          %v401 = vpack.c.bf16 %v397, %v397
          %402 = vrot.lane.b32.xlu0 %v368, 112
          %v403 = vpop.permute.xlu0 %402
          %v405 = vsel %vm372, %v401, 0
          %vm407 = vcmask 1043456
          %v409 = vsel %vm407, %v403, 0
          %411 = vmatpush.bf16.msra.mxu0 0
          %412 = vmatpush.bf16.msra.mxu0 0
          %413 = vmatpush.bf16.msra.mxu0 0
          %414 = vmatpush.bf16.msra.mxu0 0
          %415 = vmatpush.bf16.msra.mxu0 0
          %416 = vmatpush.bf16.msra.mxu0 0
          %417 = vmatpush.bf16.msra.mxu0 0
          %418 = vmatpush.bf16.msra.mxu0 %v409
          %419 = vmatmul.bf16.gmra.mxu0 %v405
          %v420 = vpop.f32.mrf.mxu0
          %v421 = vadd.f32 0.0, %v420
          %v422 = vpop.f32.mrf.mxu0
          %423 = vdwg.mxu0
          %v424 = vrcp.pop %v400
          %v425 = vmul.f32 %v421, %v424
          %v426 = vpack.c.bf16 %v425, %v425
          %s427 = smul.addr %s320, 4
          %s428 = scalar_lea.vmem [#allocation3], %s427
          %vm429 = vcmask 60416
          %430 = vst.msk [vmem:[%s428] sm:$0xf] %vm429, %v426
        $region53: #{tpu_custom_call.1} parent=47 // loop_footer
          %s324 = sadd.s32 1, %s320
        $region54: #{tpu_custom_call.1} parent=47 // loop_footer_branch
          %319 = sbr.rel target = $region50
        $region55: #{tpu_custom_call.1} parent=47 // loop_exit
          _
        %v431 = vld [vmem:[#allocation3] sm:$0xf]
        %vm432 = vcmask 60416
        %433 = vst.msk [vmem:[#allocation4] sm:$0xf] %vm432, %v431
        %s434 = scalar_lea.vmem [#allocation3], 4
        %v435 = vld [vmem:[%s434] sm:$0xf]
        %437 = vrot.lane.b32.xlu0 %v435, 8
        %v438 = vpop.permute.xlu0 %437
        %vm440 = vcmask 126016
        %441 = vst.msk [vmem:[#allocation4] sm:$0xf] %vm440, %v438
        %s442 = scalar_lea.vmem [#allocation3], 8
        %v443 = vld [vmem:[%s442] sm:$0xf]
        %445 = vrot.lane.b32.xlu0 %v443, 16
        %v446 = vpop.permute.xlu0 %445
        %vm448 = vcmask 191616
        %449 = vst.msk [vmem:[#allocation4] sm:$0xf] %vm448, %v446
        %s450 = scalar_lea.vmem [#allocation3], 12
        %v451 = vld [vmem:[%s450] sm:$0xf]
        %453 = vrot.lane.b32.xlu0 %v451, 24
        %v454 = vpop.permute.xlu0 %453
        %vm456 = vcmask 257216
        %457 = vst.msk [vmem:[#allocation4] sm:$0xf] %vm456, %v454
        %v458 = vld [vmem:[#allocation4] sm:$0xf]
        %v459 = vld [vmem:[%s5] sm:$0xf]
        %v460 = vld [vmem:[%s5 + $0x4] sm:$0xf]
        %v461 = vld [vmem:[%s5 + $0x8] sm:$0xf]
        %v462 = vld [vmem:[%s5 + $0xc] sm:$0xf]
        %v463 = vld [vmem:[%s6] sm:$0x1]
        %v465 = vperm.slane %v463, 0
        %v471 = vunpack.c.l.b16 %v459
        %v472 = vunpack.c.l.b16 %v460
        %v473 = vunpack.c.l.b16 %v461
        %v474 = vunpack.c.l.b16 %v462
        %v475 = vpack.c.b16 %v472, %v471
        %v476 = vpack.c.b16 %v474, %v473
        %v480 = vsel %vm276, %v458, 0
        %482 = vmatpush.bf16.msra.mxu0 0
        %483 = vmatpush.bf16.msra.mxu0 0
        %484 = vmatpush.bf16.msra.mxu0 0
        %485 = vmatpush.bf16.msra.mxu0 0
        %486 = vmatpush.bf16.msra.mxu0 0
        %487 = vmatpush.bf16.msra.mxu0 0
        %488 = vmatpush.bf16.msra.mxu0 %v476
        %489 = vmatpush.bf16.msra.mxu0 %v475
        %490 = vmatmul.bf16.gmra.mxu0 %v480
        %v491 = vpop.f32.mrf.mxu0
        %v492 = vadd.f32 %v465, %v491
        %v493 = vpop.f32.mrf.mxu0
        %494 = vdwg.mxu0
        %495 = vst.msk [vmem:[%s269] sm:$0xff] %vm276, %v492
        %s496 = sand.u32 %s181, 1
        %s497 = scalar_lea.sflag [#allocation6], %s496
        %s498 = sand.u32 %s181, 1
        %s499 = smul.addr %s498, 8
        %s500 = scalar_lea.vmem [#allocation5], %s499
        // Predicated region
        $region56: #{tpu_custom_call.1} parent=47 // pred_check
          %p501 = pneg %p191
        $region57: #{tpu_custom_call.1} parent=47 // pred_check_branch
          %503 = sbr.rel (%p501) target = $region59
        $region58: #{tpu_custom_call.1} parent=47 // pred_region
          %505 = vsyncadd %s497, 0
          %s506 = smul.addr %s21, 8
          %s507 = scalar_lea.hbm %s7, %s506
          %s509 = sshll.u32 %s500, 4
          %s510 = int_to_ptr.vmem [resolvable:$true] %s509
          %s511 = sshll.u32 %s507, 4
          %s512 = int_to_ptr.hbm [resolvable:$true] %s511
          %514 = dma.vmem_to_hbm [thread:$0]  %s510, 128, %s512, %s497
        $region59: #{tpu_custom_call.1} parent=47 // pred_fallthru
          _
      $region48: #{tpu_custom_call.1} parent=5 // pred_fallthru
        _
      %p515 = scmp.le.s32.totalorder 2, %s16
      // Predicated region
      $region60: #{tpu_custom_call.1} parent=5 // pred_check
        %p516 = pneg %p515
      $region61: #{tpu_custom_call.1} parent=5 // pred_check_branch
        %518 = sbr.rel (%p516) target = $region63
      $region62: #{tpu_custom_call.1} parent=5 // pred_region
        %s519 = ssub.s32 %s16, 2
        // Predicated region
        $region64: #{tpu_custom_call.1} parent=62 // pred_check
          %p520 = pneg %p197
        $region65: #{tpu_custom_call.1} parent=62 // pred_check_branch
          %522 = sbr.rel (%p520) target = $region67
        $region66: #{tpu_custom_call.1} parent=62 // pred_region
          %s523 = sand.u32 %s182, 1
          %s524 = scalar_lea.sflag [#allocation6], %s523
          %s525 = sand.u32 %s182, 1
          %s526 = smul.addr %s525, 8
          %s527 = scalar_lea.vmem [#allocation5], %s526
          %529 = dma.done %s524, 128
        $region67: #{tpu_custom_call.1} parent=62 // pred_fallthru
          _
      $region63: #{tpu_custom_call.1} parent=5 // pred_fallthru
        _
    $region6: #{tpu_custom_call.1} parent=1 // loop_footer
      %s20 = sadd.s32 1, %s16
    $region7: #{tpu_custom_call.1} parent=1 // loop_footer_branch
      %15 = sbr.rel target = $region3
    $region8: #{tpu_custom_call.1} parent=1 // loop_exit
      _
    %530 = vsyncpa [#allocation6], 1
    %s531 = scalar_lea.sflag [#allocation6], 1
    %532 = vsyncpa %s531, 1

// kernel: tpu_custom_call.1
$region0: #{tpu_custom_call.1}
  #allocation0 [shape = 'u32[]', space=smem, size = 0x4, offset = 0x4, fixed_abs, tag = 'smem constant byte address 0x4 - core index']
  #allocation1 [shape = 'u32[72,128]{1,0:T(1,128)}', space=vmem, size = 0x9000, scoped, tag = 'internal scratch']
  #allocation2 [shape = 'bf16[8,32]{1,0:T(8,128)(2,1)}', space=vmem, size = 0x800, scoped, tag = 'scratch operand']
  #allocation3 [shape = 'bf16[4,8,8]{2,1,0:T(8,128)(2,1)}', space=vmem, size = 0x2000, scoped, tag = 'scratch operand']
  #allocation4 [shape = 'bf16[8,32]{1,0:T(8,128)(2,1)}', space=vmem, size = 0x800, scoped, tag = 'scratch operand']
  %s0 = inlined_call_operand.vmem [shape: f32[2,8,32], index: 0, kind: input, shape index: {}]
  %s1 = inlined_call_operand.vmem [shape: f32[1,32], index: 1, kind: input, shape index: {}]
  %s2 = inlined_call_operand.vmem [shape: f32[1,32], index: 2, kind: input, shape index: {}]
  %s3 = inlined_call_operand.vmem [shape: bf16[4,32,24], index: 3, kind: input, shape index: {}]
  %s4 = inlined_call_operand.vmem [shape: f32[4,1,24], index: 4, kind: input, shape index: {}]
  %s5 = inlined_call_operand.vmem [shape: bf16[32,32], index: 5, kind: input, shape index: {}]
  %s6 = inlined_call_operand.vmem [shape: f32[1,32], index: 6, kind: input, shape index: {}]
  %s7 = inlined_call_operand.hbm [shape: f32[2,8,32], index: 7, kind: output, shape index: {}]
  %s8 = sld [smem:[#allocation0]]
  $region68: #{tpu_custom_call.1} parent=0
    _
  %s10 = ssub.s32 1, %s8
  %s11 = scalar_select 0, %s10, %s8
  $region1: #{tpu_custom_call.1} parent=0
    #allocation5 [shape = 'u8[8192]{0}', space=vmem, size = 0x2000, scoped, tag = 'output window, operand 0']
    #allocation6 [shape = 's32[2]{0}', space=sflag, size = 0x8, scoped, tag = 'scoped memory for tpu_custom_call.1']
    %12 = vsyncpa [#allocation6], 0
    %s13 = scalar_lea.sflag [#allocation6], 1
    %14 = vsyncpa %s13, 0
    loop: start=0, step=1, limit=4
    $region2: #{tpu_custom_call.1} parent=1 // loop_pre_header
      _
    $region3: #{tpu_custom_call.1} parent=1 // loop_header
      %s16 = sphi 0, %s20
      %p17 = scmp.ge.s32.totalorder %s16, 4
      %s26 = sphi 0, %s28
      %s29 = sphi 0, %s26
      %s30 = sphi 0, %s29
      %s46 = sphi 0, %s30
      %s50 = sphi 0, %s50
      %s52 = sphi 0, %s50
      %s53 = sphi 0, %s52
      %s67 = sphi 0, %s53
      %s71 = sphi 0, %s71
      %s73 = sphi 0, %s71
      %s74 = sphi 0, %s73
      %s88 = sphi 0, %s74
      %s92 = sphi 0, %s92
      %s94 = sphi 0, %s92
      %s95 = sphi 0, %s94
      %s109 = sphi 0, %s95
      %s113 = sphi 0, %s113
      %s115 = sphi 0, %s113
      %s116 = sphi 0, %s115
      %s130 = sphi 0, %s116
      %s134 = sphi 0, %s134
      %s136 = sphi 0, %s134
      %s137 = sphi 0, %s136
      %s151 = sphi 0, %s137
      %s155 = sphi 0, %s155
      %s157 = sphi 0, %s155
      %s158 = sphi 0, %s157
      %s172 = sphi 0, %s158
      %s178 = sphi 0, %s180
      %s181 = sphi 0, %s178
      %s182 = sphi 0, %s181
      %s198 = sphi 0, %s182
    $region4: #{tpu_custom_call.1} parent=1 // loop_header_branch
      %19 = sbr.rel (%p17) target = $region8
    $region5: #{tpu_custom_call.1} parent=1 // loop_body
      %s21 = ssub.s32 %s16, 1
      %s22 = ssub.s32 %s16, 2
      %s23 = sadd.s32 %s16, 1
      %s24 = ssub.s32 %s16, %s23
      %p25 = scmp.eq.s32.totalorder %s24, 0
      %s27 = sadd.s32 %s26, 1
      %s28 = scalar_select %p25, %s26, %s27
      %p31 = pneg %p25
      %p32 = scmp.eq.s32.totalorder %s16, 1
      %p33 = por %p31, %p32
      %p34 = scmp.ne.s32.totalorder %s26, %s29
      %p35 = scmp.eq.s32.totalorder %s16, 0
      %p36 = por %p34, %p35
      %p37 = scmp.ne.s32.totalorder %s26, %s29
      %p38 = scmp.eq.s32.totalorder %s21, 1
      %p39 = por %p37, %p38
      %p40 = scmp.ne.s32.totalorder %s29, %s30
      %p41 = scmp.eq.s32.totalorder %s21, 0
      %p42 = por %p40, %p41
      %p43 = scmp.ne.s32.totalorder %s29, %s30
      %p44 = scmp.eq.s32.totalorder %s22, 1
      %p45 = por %p43, %p44
      %p47 = scmp.ne.s32.totalorder %s30, %s46
      %p48 = scmp.eq.s32.totalorder %s22, 0
      %p49 = por %p47, %p48
      %s51 = sadd.s32 %s50, 1
      %p54 = scmp.eq.s32.totalorder %s16, 1
      %p55 = scmp.ne.s32.totalorder %s50, %s52
      %p56 = scmp.eq.s32.totalorder %s16, 0
      %p57 = por %p55, %p56
      %p58 = scmp.ne.s32.totalorder %s50, %s52
      %p59 = scmp.eq.s32.totalorder %s21, 1
      %p60 = por %p58, %p59
      %p61 = scmp.ne.s32.totalorder %s52, %s53
      %p62 = scmp.eq.s32.totalorder %s21, 0
      %p63 = por %p61, %p62
      %p64 = scmp.ne.s32.totalorder %s52, %s53
      %p65 = scmp.eq.s32.totalorder %s22, 1
      %p66 = por %p64, %p65
      %p68 = scmp.ne.s32.totalorder %s53, %s67
      %p69 = scmp.eq.s32.totalorder %s22, 0
      %p70 = por %p68, %p69
      %s72 = sadd.s32 %s71, 1
      %p75 = scmp.eq.s32.totalorder %s16, 1
      %p76 = scmp.ne.s32.totalorder %s71, %s73
      %p77 = scmp.eq.s32.totalorder %s16, 0
      %p78 = por %p76, %p77
      %p79 = scmp.ne.s32.totalorder %s71, %s73
      %p80 = scmp.eq.s32.totalorder %s21, 1
      %p81 = por %p79, %p80
      %p82 = scmp.ne.s32.totalorder %s73, %s74
      %p83 = scmp.eq.s32.totalorder %s21, 0
      %p84 = por %p82, %p83
      %p85 = scmp.ne.s32.totalorder %s73, %s74
      %p86 = scmp.eq.s32.totalorder %s22, 1
      %p87 = por %p85, %p86
      %p89 = scmp.ne.s32.totalorder %s74, %s88
      %p90 = scmp.eq.s32.totalorder %s22, 0
      %p91 = por %p89, %p90
      %s93 = sadd.s32 %s92, 1
      %p96 = scmp.eq.s32.totalorder %s16, 1
      %p97 = scmp.ne.s32.totalorder %s92, %s94
      %p98 = scmp.eq.s32.totalorder %s16, 0
      %p99 = por %p97, %p98
      %p100 = scmp.ne.s32.totalorder %s92, %s94
      %p101 = scmp.eq.s32.totalorder %s21, 1
      %p102 = por %p100, %p101
      %p103 = scmp.ne.s32.totalorder %s94, %s95
      %p104 = scmp.eq.s32.totalorder %s21, 0
      %p105 = por %p103, %p104
      %p106 = scmp.ne.s32.totalorder %s94, %s95
      %p107 = scmp.eq.s32.totalorder %s22, 1
      %p108 = por %p106, %p107
      %p110 = scmp.ne.s32.totalorder %s95, %s109
      %p111 = scmp.eq.s32.totalorder %s22, 0
      %p112 = por %p110, %p111
      %s114 = sadd.s32 %s113, 1
      %p117 = scmp.eq.s32.totalorder %s16, 1
      %p118 = scmp.ne.s32.totalorder %s113, %s115
      %p119 = scmp.eq.s32.totalorder %s16, 0
      %p120 = por %p118, %p119
      %p121 = scmp.ne.s32.totalorder %s113, %s115
      %p122 = scmp.eq.s32.totalorder %s21, 1
      %p123 = por %p121, %p122
      %p124 = scmp.ne.s32.totalorder %s115, %s116
      %p125 = scmp.eq.s32.totalorder %s21, 0
      %p126 = por %p124, %p125
      %p127 = scmp.ne.s32.totalorder %s115, %s116
      %p128 = scmp.eq.s32.totalorder %s22, 1
      %p129 = por %p127, %p128
      %p131 = scmp.ne.s32.totalorder %s116, %s130
      %p132 = scmp.eq.s32.totalorder %s22, 0
      %p133 = por %p131, %p132
      %s135 = sadd.s32 %s134, 1
      %p138 = scmp.eq.s32.totalorder %s16, 1
      %p139 = scmp.ne.s32.totalorder %s134, %s136
      %p140 = scmp.eq.s32.totalorder %s16, 0
      %p141 = por %p139, %p140
      %p142 = scmp.ne.s32.totalorder %s134, %s136
      %p143 = scmp.eq.s32.totalorder %s21, 1
      %p144 = por %p142, %p143
      %p145 = scmp.ne.s32.totalorder %s136, %s137
      %p146 = scmp.eq.s32.totalorder %s21, 0
      %p147 = por %p145, %p146
      %p148 = scmp.ne.s32.totalorder %s136, %s137
      %p149 = scmp.eq.s32.totalorder %s22, 1
      %p150 = por %p148, %p149
      %p152 = scmp.ne.s32.totalorder %s137, %s151
      %p153 = scmp.eq.s32.totalorder %s22, 0
      %p154 = por %p152, %p153
      %s156 = sadd.s32 %s155, 1
      %p159 = scmp.eq.s32.totalorder %s16, 1
      %p160 = scmp.ne.s32.totalorder %s155, %s157
      %p161 = scmp.eq.s32.totalorder %s16, 0
      %p162 = por %p160, %p161
      %p163 = scmp.ne.s32.totalorder %s155, %s157
      %p164 = scmp.eq.s32.totalorder %s21, 1
      %p165 = por %p163, %p164
      %p166 = scmp.ne.s32.totalorder %s157, %s158
      %p167 = scmp.eq.s32.totalorder %s21, 0
      %p168 = por %p166, %p167
      %p169 = scmp.ne.s32.totalorder %s157, %s158
      %p170 = scmp.eq.s32.totalorder %s22, 1
      %p171 = por %p169, %p170
      %p173 = scmp.ne.s32.totalorder %s158, %s172
      %p174 = scmp.eq.s32.totalorder %s22, 0
      %p175 = por %p173, %p174
      %s176 = ssub.s32 %s16, %s23
      %p177 = scmp.eq.s32.totalorder %s176, 0
      %s179 = sadd.s32 %s178, 1
      %s180 = scalar_select %p177, %s178, %s179
      %p183 = pneg %p177
      %p184 = scmp.eq.s32.totalorder %s16, 1
      %p185 = por %p183, %p184
      %p186 = scmp.ne.s32.totalorder %s178, %s181
      %p187 = scmp.eq.s32.totalorder %s16, 0
      %p188 = por %p186, %p187
      %p189 = scmp.ne.s32.totalorder %s178, %s181
      %p190 = scmp.eq.s32.totalorder %s21, 1
      %p191 = por %p189, %p190
      %p192 = scmp.ne.s32.totalorder %s181, %s182
      %p193 = scmp.eq.s32.totalorder %s21, 0
      %p194 = por %p192, %p193
      %p195 = scmp.ne.s32.totalorder %s181, %s182
      %p196 = scmp.eq.s32.totalorder %s22, 1
      %p197 = por %p195, %p196
      %p199 = scmp.ne.s32.totalorder %s182, %s198
      %p200 = scmp.eq.s32.totalorder %s22, 0
      %p201 = por %p199, %p200
      %p202 = scmp.le.s32.totalorder 1, %s16
      %p203 = scmp.lt.s32.totalorder %s16, 3
      %p204 = pnand %p202, %p203
      %p205 = pneg %p204
      // Predicated region
      $region9: #{tpu_custom_call.1} parent=5 // pred_check
        _
      $region10: #{tpu_custom_call.1} parent=5 // pred_check_branch
        %207 = sbr.rel (%p204) target = $region12
      $region11: #{tpu_custom_call.1} parent=5 // pred_region
        %s208 = ssub.s32 %s16, 1
        // Predicated region
        $region13: #{tpu_custom_call.1} parent=11 // pred_check
          %p209 = pneg %p63
        $region14: #{tpu_custom_call.1} parent=11 // pred_check_branch
          %211 = sbr.rel (%p209) target = $region16
        $region15: #{tpu_custom_call.1} parent=11 // pred_region
          _
        $region16: #{tpu_custom_call.1} parent=11 // pred_fallthru
          _
        // Predicated region
        $region17: #{tpu_custom_call.1} parent=11 // pred_check
          %p212 = pneg %p84
        $region18: #{tpu_custom_call.1} parent=11 // pred_check_branch
          %214 = sbr.rel (%p212) target = $region20
        $region19: #{tpu_custom_call.1} parent=11 // pred_region
          _
        $region20: #{tpu_custom_call.1} parent=11 // pred_fallthru
          _
        // Predicated region
        $region21: #{tpu_custom_call.1} parent=11 // pred_check
          %p215 = pneg %p105
        $region22: #{tpu_custom_call.1} parent=11 // pred_check_branch
          %217 = sbr.rel (%p215) target = $region24
        $region23: #{tpu_custom_call.1} parent=11 // pred_region
          _
        $region24: #{tpu_custom_call.1} parent=11 // pred_fallthru
          _
        // Predicated region
        $region25: #{tpu_custom_call.1} parent=11 // pred_check
          %p218 = pneg %p126
        $region26: #{tpu_custom_call.1} parent=11 // pred_check_branch
          %220 = sbr.rel (%p218) target = $region28
        $region27: #{tpu_custom_call.1} parent=11 // pred_region
          _
        $region28: #{tpu_custom_call.1} parent=11 // pred_fallthru
          _
        // Predicated region
        $region29: #{tpu_custom_call.1} parent=11 // pred_check
          %p221 = pneg %p147
        $region30: #{tpu_custom_call.1} parent=11 // pred_check_branch
          %223 = sbr.rel (%p221) target = $region32
        $region31: #{tpu_custom_call.1} parent=11 // pred_region
          _
        $region32: #{tpu_custom_call.1} parent=11 // pred_fallthru
          _
        // Predicated region
        $region33: #{tpu_custom_call.1} parent=11 // pred_check
          %p224 = pneg %p168
        $region34: #{tpu_custom_call.1} parent=11 // pred_check_branch
          %226 = sbr.rel (%p224) target = $region36
        $region35: #{tpu_custom_call.1} parent=11 // pred_region
          _
        $region36: #{tpu_custom_call.1} parent=11 // pred_fallthru
          _
      $region12: #{tpu_custom_call.1} parent=5 // pred_fallthru
        _
      %p227 = scmp.lt.s32.totalorder %s16, 2
      // Predicated region
      $region37: #{tpu_custom_call.1} parent=5 // pred_check
        %p228 = pneg %p227
      $region38: #{tpu_custom_call.1} parent=5 // pred_check_branch
        %230 = sbr.rel (%p228) target = $region40
      $region39: #{tpu_custom_call.1} parent=5 // pred_region
        // Predicated region
        $region41: #{tpu_custom_call.1} parent=39 // pred_check
          %p231 = pneg %p36
        $region42: #{tpu_custom_call.1} parent=39 // pred_check_branch
          %233 = sbr.rel (%p231) target = $region44
        $region43: #{tpu_custom_call.1} parent=39 // pred_region
          %p234 = scmp.lt.s32.totalorder %s16, 1
          %s235 = scalar_select %p234, %s16, 1
          %s236 = smul.addr %s235, 8
          %s237 = scalar_lea.vmem %s0, %s236
        $region44: #{tpu_custom_call.1} parent=39 // pred_fallthru
          _
      $region40: #{tpu_custom_call.1} parent=5 // pred_fallthru
        _
      %p238 = scmp.le.s32.totalorder 1, %s16
      %p239 = scmp.lt.s32.totalorder %s16, 3
      %p240 = pnand %p238, %p239
      %p241 = pneg %p240
      // Predicated region
      $region45: #{tpu_custom_call.1} parent=5 // pred_check
        _
      $region46: #{tpu_custom_call.1} parent=5 // pred_check_branch
        %243 = sbr.rel (%p240) target = $region48
      $region47: #{tpu_custom_call.1} parent=5 // pred_region
        %s244 = ssub.s32 %s16, 1
        %p245 = scmp.lt.s32.totalorder %s21, 1
        %s246 = scalar_select %p245, %s21, 1
        %s247 = smul.addr %s246, 8
        %s248 = scalar_lea.vmem %s0, %s247
        %p249 = pneg %p42
        %p250 = pneg %p39
        %p251 = pneg %p63
        %p252 = pneg %p60
        %p253 = pneg %p84
        %p254 = pneg %p81
        %p255 = pneg %p105
        %p256 = pneg %p102
        %p257 = pneg %p126
        %p258 = pneg %p123
        %p259 = pneg %p147
        %p260 = pneg %p144
        %p261 = pneg %p168
        %p262 = pneg %p165
        %p263 = pneg %p194
        %p264 = pneg %p191
        %s265 = sand.u32 %s181, 1
        %s266 = scalar_lea.sflag [#allocation6], %s265
        %s267 = sand.u32 %s181, 1
        %s268 = smul.addr %s267, 8
        %s269 = scalar_lea.vmem [#allocation5], %s268
        %p270 = scmp.lt.s32.totalorder %s21, 1
        %s271 = scalar_select %p270, %s21, 1
        %s272 = smul.addr %s271, 8
        %s273 = scalar_lea.vmem %s0, %s272
        %v275 = vld [vmem:[%s273] sm:$0xff]
        %vm276 = vcmask 261120
        %v277 = vsel %vm276, %v275, 0.0
        %278 = vadd.xlane.f32.xlu0 %v277
        %v279 = vpop.xlane.xlu0 %278
        %v280 = vrcp.pop 32.0
        %v281 = vmul.f32 32.0, %v280
        %v282 = vsub.f32 1.0, %v281
        %v283 = vmul.f32 %v280, %v282
        %v284 = vadd.f32 %v280, %v283
        %vm285 = vweird.f32 %v280
        %v286 = vsel %vm285, %v280, %v284
        %v287 = vmul.f32 %v279, %v286
        %v288 = vsub.f32 %v275, %v287
        %v289 = vmul.f32 %v288, %v288
        %v290 = vsel %vm276, %v289, 0.0
        %291 = vadd.xlane.f32.xlu0 %v290
        %v292 = vpop.xlane.xlu0 %291
        %v293 = vmul.f32 %v292, %v286
        %v294 = vadd.f32 %v293, 1e-06
        %v295 = vrsqrt.pop %v294
        %v296 = vmul.f32 %v295, %v294
        %v297 = vmul.f32 %v296, %v295
        %v298 = vmul.f32 0.5, %v297
        %v299 = vsub.f32 1.5, %v298
        %v300 = vmul.f32 %v295, %v299
        %vm301 = vweird.f32 %v294
        %vm302 = vweird.f32 %v295
        %vm303 = vmor %vm301, %vm302
        %v304 = vsel %vm303, %v295, %v300
        %v305 = vmul.f32 %v288, %v304
        %v306 = vld [vmem:[%s1] sm:$0x1]
        %v308 = vperm.slane %v306, 0
        %v310 = vmul.f32 %v305, %v308
        %v311 = vld [vmem:[%s2] sm:$0x1]
        %v313 = vperm.slane %v311, 0
        %v315 = vadd.f32 %v310, %v313
        %v316 = vpack.c.bf16 %v315, %v315
        %vm317 = vcmask 257024
        %318 = vst.msk [vmem:[#allocation2] sm:$0xf] %vm317, %v316
        loop: start=0, step=1, limit=4
        $region49: #{tpu_custom_call.1} parent=47 // loop_pre_header
          _
        $region50: #{tpu_custom_call.1} parent=47 // loop_header
          %s320 = sphi 0, %s324
          %p321 = scmp.ge.s32.totalorder %s320, 4
        $region51: #{tpu_custom_call.1} parent=47 // loop_header_branch
          %323 = sbr.rel (%p321) target = $region55
        $region52: #{tpu_custom_call.1} parent=47 // loop_body
          %s325 = smul.u32 %s320, 4
          %s326 = smul.addr %s325, 4
          %s327 = scalar_lea.vmem %s3, %s326
          %v328 = vld [vmem:[%s327] sm:$0xf]
          %v329 = vld [vmem:[%s327 + $0x4] sm:$0xf]
          %v330 = vld [vmem:[%s327 + $0x8] sm:$0xf]
          %v331 = vld [vmem:[%s327 + $0xc] sm:$0xf]
          %s332 = scalar_lea.vmem %s4, %s320
          %v333 = vld [vmem:[%s332] sm:$0x1]
          %v334 = vld [vmem:[#allocation2] sm:$0xf]
          %v336 = vperm.slane %v333, 0
          %v342 = vunpack.c.l.b16 %v328
          %v343 = vunpack.c.l.b16 %v329
          %v344 = vunpack.c.l.b16 %v330
          %v345 = vunpack.c.l.b16 %v331
          %v346 = vpack.c.b16 %v343, %v342
          %v347 = vpack.c.b16 %v345, %v344
          %v351 = vsel %vm276, %v334, 0
          %353 = vmatpush.bf16.msra.mxu0 0
          %354 = vmatpush.bf16.msra.mxu0 0
          %355 = vmatpush.bf16.msra.mxu0 0
          %356 = vmatpush.bf16.msra.mxu0 0
          %357 = vmatpush.bf16.msra.mxu0 0
          %358 = vmatpush.bf16.msra.mxu0 0
          %359 = vmatpush.bf16.msra.mxu0 %v347
          %360 = vmatpush.bf16.msra.mxu0 %v346
          %361 = vmatmul.bf16.gmra.mxu0 %v351
          %v362 = vpop.f32.mrf.mxu0
          %v363 = vadd.f32 %v336, %v362
          %v364 = vpop.f32.mrf.mxu0
          %365 = vdwg.mxu0
          %v366 = vmul.f32 %v363, 0.35355338
          %v367 = vpack.c.bf16 %v366, %v366
          %v368 = vpack.c.bf16 %v363, %v363
          %370 = vrot.lane.b32.xlu0 %v368, 120
          %v371 = vpop.permute.xlu0 %370
          %vm372 = vcmask 64512
          %v374 = vsel %vm372, %v367, 0
          %v377 = vsel %vm372, %v371, 0
          %379 = vmatpush.bf16.xpose.msra.mxu0 0
          %380 = vmatpush.bf16.xpose.msra.mxu0 0
          %381 = vmatpush.bf16.xpose.msra.mxu0 0
          %382 = vmatpush.bf16.xpose.msra.mxu0 0
          %383 = vmatpush.bf16.xpose.msra.mxu0 0
          %384 = vmatpush.bf16.xpose.msra.mxu0 0
          %385 = vmatpush.bf16.xpose.msra.mxu0 0
          %386 = vmatpush.bf16.xpose.msra.mxu0 %v377
          %387 = vmatmul.bf16.gmra.mxu0 %v374
          %v388 = vpop.f32.mrf.mxu0
          %v389 = vadd.f32 0.0, %v388
          %v390 = vpop.f32.mrf.mxu0
          %391 = vdwg.mxu0
          %v392 = vsel %vm372, %v389, -inf
          %393 = vmax.xlane.f32.xlu0 %v392
          %v394 = vpop.xlane.xlu0 %393
          %v395 = vsub.f32 %v389, %v394
          %v396 = vmul.f32 %v395, 1.442695
          %v397 = vpow.pop %v396
          %v398 = vsel %vm372, %v397, 0.0
          %399 = vadd.xlane.f32.xlu0 %v398
          %v400 = vpop.xlane.xlu0 %399
          %v401 = vpack.c.bf16 %v397, %v397
          %402 = vrot.lane.b32.xlu0 %v368, 112
          %v403 = vpop.permute.xlu0 %402
          %v405 = vsel %vm372, %v401, 0
          %vm407 = vcmask 1043456
          %v409 = vsel %vm407, %v403, 0
          %411 = vmatpush.bf16.msra.mxu0 0
          %412 = vmatpush.bf16.msra.mxu0 0
          %413 = vmatpush.bf16.msra.mxu0 0
          %414 = vmatpush.bf16.msra.mxu0 0
          %415 = vmatpush.bf16.msra.mxu0 0
          %416 = vmatpush.bf16.msra.mxu0 0
          %417 = vmatpush.bf16.msra.mxu0 0
          %418 = vmatpush.bf16.msra.mxu0 %v409
          %419 = vmatmul.bf16.gmra.mxu0 %v405
          %v420 = vpop.f32.mrf.mxu0
          %v421 = vadd.f32 0.0, %v420
          %v422 = vpop.f32.mrf.mxu0
          %423 = vdwg.mxu0
          %v424 = vrcp.pop %v400
          %v425 = vmul.f32 %v421, %v424
          %v426 = vpack.c.bf16 %v425, %v425
          %s427 = smul.addr %s320, 4
          %s428 = scalar_lea.vmem [#allocation3], %s427
          %vm429 = vcmask 60416
          %430 = vst.msk [vmem:[%s428] sm:$0xf] %vm429, %v426
        $region53: #{tpu_custom_call.1} parent=47 // loop_footer
          %s324 = sadd.s32 1, %s320
        $region54: #{tpu_custom_call.1} parent=47 // loop_footer_branch
          %319 = sbr.rel target = $region50
        $region55: #{tpu_custom_call.1} parent=47 // loop_exit
          _
        %v431 = vld [vmem:[#allocation3] sm:$0xf]
        %vm432 = vcmask 60416
        %433 = vst.msk [vmem:[#allocation4] sm:$0xf] %vm432, %v431
        %s434 = scalar_lea.vmem [#allocation3], 4
        %v435 = vld [vmem:[%s434] sm:$0xf]
        %437 = vrot.lane.b32.xlu0 %v435, 8
        %v438 = vpop.permute.xlu0 %437
        %vm440 = vcmask 126016
        %441 = vst.msk [vmem:[#allocation4] sm:$0xf] %vm440, %v438
        %s442 = scalar_lea.vmem [#allocation3], 8
        %v443 = vld [vmem:[%s442] sm:$0xf]
        %445 = vrot.lane.b32.xlu0 %v443, 16
        %v446 = vpop.permute.xlu0 %445
        %vm448 = vcmask 191616
        %449 = vst.msk [vmem:[#allocation4] sm:$0xf] %vm448, %v446
        %s450 = scalar_lea.vmem [#allocation3], 12
        %v451 = vld [vmem:[%s450] sm:$0xf]
        %453 = vrot.lane.b32.xlu0 %v451, 24
        %v454 = vpop.permute.xlu0 %453
        %vm456 = vcmask 257216
        %457 = vst.msk [vmem:[#allocation4] sm:$0xf] %vm456, %v454
        %v458 = vld [vmem:[#allocation4] sm:$0xf]
        %v459 = vld [vmem:[%s5] sm:$0xf]
        %v460 = vld [vmem:[%s5 + $0x4] sm:$0xf]
        %v461 = vld [vmem:[%s5 + $0x8] sm:$0xf]
        %v462 = vld [vmem:[%s5 + $0xc] sm:$0xf]
        %v463 = vld [vmem:[%s6] sm:$0x1]
        %v465 = vperm.slane %v463, 0
        %v471 = vunpack.c.l.b16 %v459
        %v472 = vunpack.c.l.b16 %v460
        %v473 = vunpack.c.l.b16 %v461
        %v474 = vunpack.c.l.b16 %v462
        %v475 = vpack.c.b16 %v472, %v471
        %v476 = vpack.c.b16 %v474, %v473
        %v480 = vsel %vm276, %v458, 0
        %482 = vmatpush.bf16.msra.mxu0 0
        %483 = vmatpush.bf16.msra.mxu0 0
        %484 = vmatpush.bf16.msra.mxu0 0
        %485 = vmatpush.bf16.msra.mxu0 0
        %486 = vmatpush.bf16.msra.mxu0 0
        %487 = vmatpush.bf16.msra.mxu0 0
        %488 = vmatpush.bf16.msra.mxu0 %v476
        %489 = vmatpush.bf16.msra.mxu0 %v475
        %490 = vmatmul.bf16.gmra.mxu0 %v480
        %v491 = vpop.f32.mrf.mxu0
        %v492 = vadd.f32 %v465, %v491
        %v493 = vpop.f32.mrf.mxu0
        %494 = vdwg.mxu0
        %495 = vst.msk [vmem:[%s269] sm:$0xff] %vm276, %v492
        %s496 = sand.u32 %s181, 1
        %s497 = scalar_lea.sflag [#allocation6], %s496
        %s498 = sand.u32 %s181, 1
        %s499 = smul.addr %s498, 8
        %s500 = scalar_lea.vmem [#allocation5], %s499
        // Predicated region
        $region56: #{tpu_custom_call.1} parent=47 // pred_check
          %p501 = pneg %p191
        $region57: #{tpu_custom_call.1} parent=47 // pred_check_branch
          %503 = sbr.rel (%p501) target = $region59
        $region58: #{tpu_custom_call.1} parent=47 // pred_region
          %505 = vsyncadd %s497, 0
          %s506 = smul.addr %s21, 8
          %s507 = scalar_lea.hbm %s7, %s506
          %s509 = sshll.u32 %s500, 4
          %s510 = int_to_ptr.vmem [resolvable:$true] %s509
          %s511 = sshll.u32 %s507, 4
          %s512 = int_to_ptr.hbm [resolvable:$true] %s511
          %514 = dma.vmem_to_hbm [thread:$0]  %s510, 128, %s512, %s497
        $region59: #{tpu_custom_call.1} parent=47 // pred_fallthru
          _
      $region48: #{tpu_custom_call.1} parent=5 // pred_fallthru
        _
      %p515 = scmp.le.s32.totalorder 2, %s16
      // Predicated region
      $region60: #{tpu_custom_call.1} parent=5 // pred_check
        %p516 = pneg %p515
      $region61: #{tpu_custom_call.1} parent=5 // pred_check_branch
        %518 = sbr.rel (%p516) target = $region63
      $region62: #{tpu_custom_call.1} parent=5 // pred_region
        %s519 = ssub.s32 %s16, 2
        // Predicated region
        $region64: #{tpu_custom_call.1} parent=62 // pred_check
          %p520 = pneg %p197
        $region65: #{tpu_custom_call.1} parent=62 // pred_check_branch
          %522 = sbr.rel (%p520) target = $region67
        $region66: #{tpu_custom_call.1} parent=62 // pred_region
          %s523 = sand.u32 %s182, 1
          %s524 = scalar_lea.sflag [#allocation6], %s523
          %s525 = sand.u32 %s182, 1
          %s526 = smul.addr %s525, 8
          %s527 = scalar_lea.vmem [#allocation5], %s526
          %529 = dma.done %s524, 128
        $region67: #{tpu_custom_call.1} parent=62 // pred_fallthru
          _
      $region63: #{tpu_custom_call.1} parent=5 // pred_fallthru
        _
    $region6: #{tpu_custom_call.1} parent=1 // loop_footer
      %s20 = sadd.s32 1, %s16
    $region7: #{tpu_custom_call.1} parent=1 // loop_footer_branch
      %15 = sbr.rel target = $region3
    $region8: #{tpu_custom_call.1} parent=1 // loop_exit
      _
    %530 = vsyncpa [#allocation6], 1
    %s531 = scalar_lea.sflag [#allocation6], 1
    %532 = vsyncpa %s531, 1

</llo_original>
